<compile_context>
chip_gen: v5e
topology: v5e:2x2
jax: 0.10.0
libtpu: 0.0.40
codegen_flags: <defaults>
</compile_context>

<pallas_src>
import math

import jax
import jax.numpy as jnp
from jax.experimental import pallas as pl
from jax.experimental.pallas import tpu as pltpu

# ----------------------------- configuration -------------------------------
DIM = 64            # args.dim
N_HEADS = 4         # args.n_heads
N_KV_HEADS = 2      # args.n_kv_heads
HEAD_DIM = DIM // N_HEADS          # 16
N_REP = N_HEADS // N_KV_HEADS      # 2
MULTIPLE_OF = 32
EPS = 1e-5
BATCH = 2
SEQ = 8

# FeedForward hidden dim (same arithmetic as the module's __init__)
_hidden = int(2 * (4 * DIM) / 3)
HIDDEN = MULTIPLE_OF * ((_hidden + MULTIPLE_OF - 1) // MULTIPLE_OF)   # 192

SCALE = 1.0 / math.sqrt(DIM / N_HEADS)   # head_dim = dim / n_heads

QK_WIDTH = 2 * N_HEADS * HEAD_DIM        # 128: q block (64) | expanded-k block (64)


# ------------------------------ fused kernel --------------------------------
def encoder_block_kernel(x_ref, g_attn_ref, g_ffn_ref, wqkv_ref, wo_ref,
                         w13_ref, w2_ref, cos_ref, sneg_ref, spos_ref, o_ref):
    """Whole encoder block in one invocation.

    x_ref : (B*S, D) f32          wqkv_ref : (D, 3*H*Dh) = (64, 192)
    wo_ref: (H*Dh, D)             w13_ref  : (D, 2*HIDDEN) = (64, 384)
    w2_ref: (HIDDEN, D)           cos/sneg/spos_ref : (B*S, 128) rotary lane tables
    o_ref : (B*S, D)
    """
    x = x_ref[...]                                               # (16, 64)

    # ---- attention_norm (RMSNorm) ----
    ms = jnp.mean(x * x, axis=-1, keepdims=True)
    xn = x * jax.lax.rsqrt(ms + EPS) * g_attn_ref[...]

    # ---- fused QKV projection (k/v heads pre-expanded for GQA) ----
    qkv = jnp.dot(xn, wqkv_ref[...], preferred_element_type=jnp.float32)  # (16, 192)
    qk = qkv[:, :QK_WIDTH]                                                # (16, 128)
    v = qkv[:, QK_WIDTH:]                                                 # (16, 64)

    # ---- rotary embedding on the q|k slab via lane rotates (XLU) + VPU ----
    # out[2i]   = x[2i]*cos - x[2i+1]*sin   (sign folded into sneg table)
    # out[2i+1] = x[2i+1]*cos + x[2i]*sin   (selected by spos table)
    left = pltpu.roll(qk, QK_WIDTH - 1, axis=1)    # lane j <- qk[j+1]
    right = pltpu.roll(qk, 1, axis=1)              # lane j <- qk[j-1]
    qk = qk * cos_ref[...] + left * sneg_ref[...] + right * spos_ref[...]

    # ---- grouped-query attention: per head, batched over B with 3-D einsums ----
    head_outs = []
    for h in range(N_HEADS):
        q_h = qk[:, h * HEAD_DIM:(h + 1) * HEAD_DIM].reshape(BATCH, SEQ, HEAD_DIM)
        k_h = qk[:, N_HEADS * HEAD_DIM + h * HEAD_DIM:
                    N_HEADS * HEAD_DIM + (h + 1) * HEAD_DIM].reshape(BATCH, SEQ, HEAD_DIM)
        v_h = v[:, h * HEAD_DIM:(h + 1) * HEAD_DIM].reshape(BATCH, SEQ, HEAD_DIM)
        s = jnp.einsum('bqd,bkd->bqk', q_h, k_h,
                       preferred_element_type=jnp.float32) * SCALE         # (B, S, S)
        s = s - jnp.max(s, axis=-1, keepdims=True)
        p = jnp.exp(s)
        p = p * pl.reciprocal(jnp.sum(p, axis=-1, keepdims=True), approx=True)
        o_h = jnp.einsum('bqk,bkd->bqd', p, v_h,
                         preferred_element_type=jnp.float32)               # (B, S, Dh)
        head_outs.append(o_h.reshape(BATCH * SEQ, HEAD_DIM))
    attn = jnp.concatenate(head_outs, axis=-1)                             # (16, 64)

    h_res = x + jnp.dot(attn, wo_ref[...], preferred_element_type=jnp.float32)

    # ---- ffn_norm + SwiGLU FFN (w1 | w3 fused) ----
    ms2 = jnp.mean(h_res * h_res, axis=-1, keepdims=True)
    hn = h_res * jax.lax.rsqrt(ms2 + EPS) * g_ffn_ref[...]
    h13 = jnp.dot(hn, w13_ref[...], preferred_element_type=jnp.float32)    # (16, 384)
    a = h13[:, :HIDDEN]
    b = h13[:, HIDDEN:]
    y = jnp.dot(a * jax.nn.sigmoid(a) * b, w2_ref[...],
                preferred_element_type=jnp.float32)                        # (16, 64)
    o_ref[...] = h_res + y


# ------------------------------ one-time prep --------------------------------
def prepare_inputs(params, cos, sin):
    """Hoisted constant construction: fused weights + rotary lane tables."""
    def expand_kv(w):     # fold repeat_kv into the weight: (D, Hkv*Dh) -> (D, H*Dh)
        w3 = w.reshape(DIM, N_KV_HEADS, HEAD_DIM)
        return jnp.repeat(w3, N_REP, axis=1).reshape(DIM, N_HEADS * HEAD_DIM)

    wqkv = jnp.concatenate(
        [params["wq"], expand_kv(params["wk"]), expand_kv(params["wv"])], axis=1)
    w13 = jnp.concatenate([params["w1"], params["w3"]], axis=1)

    # rotary tables for the (B*S, 128) q|k slab
    cos_i = jnp.repeat(cos, 2, axis=-1)          # (S, Dh) interleaved pairs
    sin_i = jnp.repeat(sin, 2, axis=-1)
    parity = jnp.arange(HEAD_DIM) % 2
    sin_neg = jnp.where(parity == 0, -sin_i, 0.0)   # multiplies roll(-1) term (even lanes)
    sin_pos = jnp.where(parity == 1, sin_i, 0.0)    # multiplies roll(+1) term (odd lanes)

    def lane_table(t):   # tile over 2*H head blocks (q|k) and over the batch rows
        return jnp.tile(jnp.tile(t, (1, 2 * N_HEADS)), (BATCH, 1))   # (B*S, 128)

    return {
        "g_attn": params["attn_norm"], "g_ffn": params["ffn_norm"],
        "wqkv": wqkv, "wo": params["wo"], "w13": w13, "w2": params["w2"],
        "cos_t": lane_table(cos_i),
        "sneg_t": lane_table(sin_neg),
        "spos_t": lane_table(sin_pos),
    }


# ------------------------------ forward --------------------------------------
@jax.jit
def encoder_block(x, prep):
    B, S, D = x.shape
    x2 = x.reshape(B * S, D)
    out2 = pl.pallas_call(
        encoder_block_kernel,
        out_shape=jax.ShapeDtypeStruct((B * S, D), jnp.float32),
    )(x2, prep["g_attn"], prep["g_ffn"], prep["wqkv"], prep["wo"],
      prep["w13"], prep["w2"], prep["cos_t"], prep["sneg_t"], prep["spos_t"])
    return out2.reshape(B, S, D)


# ------------------------------ reference (plain JAX) ------------------------
def encoder_block_ref(x, params, cos, sin):
    def rms(v, g):
        ms = jnp.mean(v * v, axis=-1, keepdims=True)
        return v * jax.lax.rsqrt(ms + EPS) * g

    def rotary(v, n_heads):
        B, S, _ = v.shape
        vr = v.reshape(B, S, n_heads, HEAD_DIM // 2, 2)
        re, im = vr[..., 0], vr[..., 1]
        c = cos[None, :, None, :]
        s = sin[None, :, None, :]
        out = jnp.stack([re * c - im * s, re * s + im * c], axis=-1)
        return out.reshape(B, S, n_heads * HEAD_DIM)

    xn = rms(x, params["attn_norm"][0])
    xq = rotary(xn @ params["wq"], N_HEADS).reshape(BATCH, SEQ, N_HEADS, HEAD_DIM)
    xk = rotary(xn @ params["wk"], N_KV_HEADS).reshape(BATCH, SEQ, N_KV_HEADS, HEAD_DIM)
    xv = (xn @ params["wv"]).reshape(BATCH, SEQ, N_KV_HEADS, HEAD_DIM)
    xk = jnp.repeat(xk, N_REP, axis=2)
    xv = jnp.repeat(xv, N_REP, axis=2)
    q = jnp.transpose(xq, (0, 2, 1, 3))
    k = jnp.transpose(xk, (0, 2, 1, 3))
    v = jnp.transpose(xv, (0, 2, 1, 3))
    s = jnp.einsum("bhqd,bhkd->bhqk", q, k) * SCALE
    p = jax.nn.softmax(s, axis=-1)
    o = jnp.einsum("bhqk,bhkd->bhqd", p, v)
    o = jnp.transpose(o, (0, 2, 1, 3)).reshape(BATCH, SEQ, DIM)
    h = x + o @ params["wo"]

    hn = rms(h, params["ffn_norm"][0])
    ff = (jax.nn.silu(hn @ params["w1"]) * (hn @ params["w3"])) @ params["w2"]
    return h + ff


# ------------------------------ main ------------------------------------------
if __name__ == "__main__":
    key = jax.random.PRNGKey(0)
    ks = jax.random.split(key, 9)

    params = {
        "attn_norm": jnp.ones((1, DIM), jnp.float32),
        "ffn_norm": jnp.ones((1, DIM), jnp.float32),
        "wq": jax.random.normal(ks[0], (DIM, N_HEADS * HEAD_DIM), jnp.float32) * 0.05,
        "wk": jax.random.normal(ks[1], (DIM, N_KV_HEADS * HEAD_DIM), jnp.float32) * 0.05,
        "wv": jax.random.normal(ks[2], (DIM, N_KV_HEADS * HEAD_DIM), jnp.float32) * 0.05,
        "wo": jax.random.normal(ks[3], (N_HEADS * HEAD_DIM, DIM), jnp.float32) * 0.05,
        "w1": jax.random.normal(ks[4], (DIM, HIDDEN), jnp.float32) * 0.05,
        "w2": jax.random.normal(ks[5], (HIDDEN, DIM), jnp.float32) * 0.05,
        "w3": jax.random.normal(ks[6], (DIM, HIDDEN), jnp.float32) * 0.05,
    }

    x = jax.random.normal(ks[7], (BATCH, SEQ, DIM), jnp.float32)

    # rotary frequencies (standard Llama formula), start_pos = 0
    theta = 10000.0 ** (-jnp.arange(0, HEAD_DIM, 2, dtype=jnp.float32) / HEAD_DIM)
    freqs = jnp.outer(jnp.arange(SEQ, dtype=jnp.float32), theta)  # (S, Dh//2)
    cos, sin = jnp.cos(freqs), jnp.sin(freqs)

    prep = prepare_inputs(params, cos, sin)           # one-time precomputation
    prep = jax.tree_util.tree_map(jax.block_until_ready, prep)

    out = encoder_block(x, prep)
    out = jax.block_until_ready(out)

    ref = encoder_block_ref(x, params, cos, sin)
    assert out.shape == (BATCH, SEQ, DIM)
    assert jnp.allclose(out, ref, atol=1e-2, rtol=1e-2), "mismatch vs JAX reference"

    print("KERNEL_OK")
</pallas_src>

<mosaic_0001>
module attributes {stable_mosaic.version = 11 : i64} {
  func.func @encoder_block_kernel(%arg0: memref<16x64xf32, #tpu.memory_space<vmem>>, %arg1: memref<1x64xf32, #tpu.memory_space<vmem>>, %arg2: memref<1x64xf32, #tpu.memory_space<vmem>>, %arg3: memref<64x192xf32, #tpu.memory_space<vmem>>, %arg4: memref<64x64xf32, #tpu.memory_space<vmem>>, %arg5: memref<64x384xf32, #tpu.memory_space<vmem>>, %arg6: memref<192x64xf32, #tpu.memory_space<vmem>>, %arg7: memref<16x128xf32, #tpu.memory_space<vmem>>, %arg8: memref<16x128xf32, #tpu.memory_space<vmem>>, %arg9: memref<16x128xf32, #tpu.memory_space<vmem>>, %arg10: memref<16x64xf32, #tpu.memory_space<vmem>>) attributes {dimension_semantics = [], scalar_prefetch = 0 : i64, scratch_operands = 0 : i64, tpu.core_type = #tpu.core_type<tc>} {
    %c0 = arith.constant 0 : index
    %c0_0 = arith.constant 0 : index
    %0 = vector.load %arg0[%c0, %c0_0] : memref<16x64xf32, #tpu.memory_space<vmem>>, vector<16x64xf32>
    %1 = arith.mulf %0, %0 : vector<16x64xf32>
    %cst = arith.constant dense<0.000000e+00> : vector<16xf32>
    %2 = vector.multi_reduction <add>, %1, %cst [1] : vector<16x64xf32> to vector<16xf32>
    %3 = vector.shape_cast %2 : vector<16xf32> to vector<16x1xf32>
    %cst_1 = arith.constant 6.400000e+01 : f32
    %4 = vector.broadcast %cst_1 : f32 to vector<16x1xf32>
    %5 = arith.divf %3, %4 : vector<16x1xf32>
    %cst_2 = arith.constant 9.99999974E-6 : f32
    %6 = vector.broadcast %cst_2 : f32 to vector<16x1xf32>
    %7 = arith.addf %5, %6 : vector<16x1xf32>
    %8 = math.rsqrt %7 : vector<16x1xf32>
    %9 = vector.broadcast %8 : vector<16x1xf32> to vector<16x64xf32>
    %10 = arith.mulf %0, %9 : vector<16x64xf32>
    %c0_3 = arith.constant 0 : index
    %c0_4 = arith.constant 0 : index
    %11 = vector.load %arg1[%c0_3, %c0_4] : memref<1x64xf32, #tpu.memory_space<vmem>>, vector<1x64xf32>
    %12 = vector.broadcast %11 : vector<1x64xf32> to vector<16x64xf32>
    %13 = arith.mulf %10, %12 : vector<16x64xf32>
    %c0_5 = arith.constant 0 : index
    %c0_6 = arith.constant 0 : index
    %14 = vector.load %arg3[%c0_5, %c0_6] : memref<64x192xf32, #tpu.memory_space<vmem>>, vector<64x192xf32>
    %cst_7 = arith.constant dense<0.000000e+00> : vector<16x192xf32>
    %15 = tpu.matmul %13, %14, %cst_7 {dimension_numbers = #tpu.dot_dimension_numbers<[1], [0], [0], [1], [0, 0, 1, 1], [], []>} : vector<16x64xf32>, vector<64x192xf32>, vector<16x192xf32> -> vector<16x192xf32>
    %16 = vector.extract_strided_slice %15 {offsets = [0, 0], sizes = [16, 128], strides = [1, 1]} : vector<16x192xf32> to vector<16x128xf32>
    %17 = vector.extract_strided_slice %15 {offsets = [0, 128], sizes = [16, 64], strides = [1, 1]} : vector<16x192xf32> to vector<16x64xf32>
    %c127_i32 = arith.constant 127 : i32
    %18 = tpu.dynamic_rotate %16 by %c127_i32 dim 1 : vector<16x128xf32>, i32 -> vector<16x128xf32>
    %c1_i32 = arith.constant 1 : i32
    %19 = tpu.dynamic_rotate %16 by %c1_i32 dim 1 : vector<16x128xf32>, i32 -> vector<16x128xf32>
    %c0_8 = arith.constant 0 : index
    %c0_9 = arith.constant 0 : index
    %20 = vector.load %arg7[%c0_8, %c0_9] : memref<16x128xf32, #tpu.memory_space<vmem>>, vector<16x128xf32>
    %21 = arith.mulf %16, %20 : vector<16x128xf32>
    %c0_10 = arith.constant 0 : index
    %c0_11 = arith.constant 0 : index
    %22 = vector.load %arg8[%c0_10, %c0_11] : memref<16x128xf32, #tpu.memory_space<vmem>>, vector<16x128xf32>
    %23 = arith.mulf %18, %22 : vector<16x128xf32>
    %24 = arith.addf %21, %23 : vector<16x128xf32>
    %c0_12 = arith.constant 0 : index
    %c0_13 = arith.constant 0 : index
    %25 = vector.load %arg9[%c0_12, %c0_13] : memref<16x128xf32, #tpu.memory_space<vmem>>, vector<16x128xf32>
    %26 = arith.mulf %19, %25 : vector<16x128xf32>
    %27 = arith.addf %24, %26 : vector<16x128xf32>
    %28 = vector.extract_strided_slice %27 {offsets = [0, 0], sizes = [16, 16], strides = [1, 1]} : vector<16x128xf32> to vector<16x16xf32>
    %29 = vector.shape_cast %28 : vector<16x16xf32> to vector<2x8x16xf32>
    %30 = vector.extract_strided_slice %27 {offsets = [0, 64], sizes = [16, 16], strides = [1, 1]} : vector<16x128xf32> to vector<16x16xf32>
    %31 = vector.shape_cast %30 : vector<16x16xf32> to vector<2x8x16xf32>
    %32 = vector.extract_strided_slice %17 {offsets = [0, 0], sizes = [16, 16], strides = [1, 1]} : vector<16x64xf32> to vector<16x16xf32>
    %33 = vector.shape_cast %32 : vector<16x16xf32> to vector<2x8x16xf32>
    "tpu.trace_start"() <{level = 10 : i32, message = "bqd,bkd->bqk"}> : () -> ()
    %cst_14 = arith.constant dense<0.000000e+00> : vector<2x8x8xf32>
    %34 = tpu.matmul %29, %31, %cst_14 {dimension_numbers = #tpu.dot_dimension_numbers<[2], [2], [1], [1], [0, 0, 0, 1, 1, 1], [0], [0]>} : vector<2x8x16xf32>, vector<2x8x16xf32>, vector<2x8x8xf32> -> vector<2x8x8xf32>
    "tpu.trace_stop"() : () -> ()
    %cst_15 = arith.constant 2.500000e-01 : f32
    %35 = vector.broadcast %cst_15 : f32 to vector<2x8x8xf32>
    %36 = arith.mulf %34, %35 : vector<2x8x8xf32>
    %cst_16 = arith.constant dense<0xFF800000> : vector<2x8xf32>
    %37 = vector.multi_reduction <maximumf>, %36, %cst_16 [2] : vector<2x8x8xf32> to vector<2x8xf32>
    %38 = vector.shape_cast %37 : vector<2x8xf32> to vector<2x8x1xf32>
    %39 = vector.broadcast %38 : vector<2x8x1xf32> to vector<2x8x8xf32>
    %40 = arith.subf %36, %39 : vector<2x8x8xf32>
    %41 = math.exp %40 : vector<2x8x8xf32>
    %cst_17 = arith.constant dense<0.000000e+00> : vector<2x8xf32>
    %42 = vector.multi_reduction <add>, %41, %cst_17 [2] : vector<2x8x8xf32> to vector<2x8xf32>
    %43 = vector.shape_cast %42 : vector<2x8xf32> to vector<2x8x1xf32>
    %44 = tpu.reciprocal %43 {approx = true} : vector<2x8x1xf32> -> vector<2x8x1xf32>
    %45 = vector.broadcast %44 : vector<2x8x1xf32> to vector<2x8x8xf32>
    %46 = arith.mulf %41, %45 : vector<2x8x8xf32>
    "tpu.trace_start"() <{level = 10 : i32, message = "bqk,bkd->bqd"}> : () -> ()
    %cst_18 = arith.constant dense<0.000000e+00> : vector<2x8x16xf32>
    %47 = tpu.matmul %46, %33, %cst_18 {dimension_numbers = #tpu.dot_dimension_numbers<[2], [1], [1], [2], [0, 0, 0, 1, 1, 2], [0], [0]>} : vector<2x8x8xf32>, vector<2x8x16xf32>, vector<2x8x16xf32> -> vector<2x8x16xf32>
    "tpu.trace_stop"() : () -> ()
    %48 = vector.shape_cast %47 : vector<2x8x16xf32> to vector<16x16xf32>
    %49 = vector.extract_strided_slice %27 {offsets = [0, 16], sizes = [16, 16], strides = [1, 1]} : vector<16x128xf32> to vector<16x16xf32>
    %50 = vector.shape_cast %49 : vector<16x16xf32> to vector<2x8x16xf32>
    %51 = vector.extract_strided_slice %27 {offsets = [0, 80], sizes = [16, 16], strides = [1, 1]} : vector<16x128xf32> to vector<16x16xf32>
    %52 = vector.shape_cast %51 : vector<16x16xf32> to vector<2x8x16xf32>
    %53 = vector.extract_strided_slice %17 {offsets = [0, 16], sizes = [16, 16], strides = [1, 1]} : vector<16x64xf32> to vector<16x16xf32>
    %54 = vector.shape_cast %53 : vector<16x16xf32> to vector<2x8x16xf32>
    "tpu.trace_start"() <{level = 10 : i32, message = "bqd,bkd->bqk"}> : () -> ()
    %cst_19 = arith.constant dense<0.000000e+00> : vector<2x8x8xf32>
    %55 = tpu.matmul %50, %52, %cst_19 {dimension_numbers = #tpu.dot_dimension_numbers<[2], [2], [1], [1], [0, 0, 0, 1, 1, 1], [0], [0]>} : vector<2x8x16xf32>, vector<2x8x16xf32>, vector<2x8x8xf32> -> vector<2x8x8xf32>
    "tpu.trace_stop"() : () -> ()
    %cst_20 = arith.constant 2.500000e-01 : f32
    %56 = vector.broadcast %cst_20 : f32 to vector<2x8x8xf32>
    %57 = arith.mulf %55, %56 : vector<2x8x8xf32>
    %cst_21 = arith.constant dense<0xFF800000> : vector<2x8xf32>
    %58 = vector.multi_reduction <maximumf>, %57, %cst_21 [2] : vector<2x8x8xf32> to vector<2x8xf32>
    %59 = vector.shape_cast %58 : vector<2x8xf32> to vector<2x8x1xf32>
    %60 = vector.broadcast %59 : vector<2x8x1xf32> to vector<2x8x8xf32>
    %61 = arith.subf %57, %60 : vector<2x8x8xf32>
    %62 = math.exp %61 : vector<2x8x8xf32>
    %cst_22 = arith.constant dense<0.000000e+00> : vector<2x8xf32>
    %63 = vector.multi_reduction <add>, %62, %cst_22 [2] : vector<2x8x8xf32> to vector<2x8xf32>
    %64 = vector.shape_cast %63 : vector<2x8xf32> to vector<2x8x1xf32>
    %65 = tpu.reciprocal %64 {approx = true} : vector<2x8x1xf32> -> vector<2x8x1xf32>
    %66 = vector.broadcast %65 : vector<2x8x1xf32> to vector<2x8x8xf32>
    %67 = arith.mulf %62, %66 : vector<2x8x8xf32>
    "tpu.trace_start"() <{level = 10 : i32, message = "bqk,bkd->bqd"}> : () -> ()
    %cst_23 = arith.constant dense<0.000000e+00> : vector<2x8x16xf32>
    %68 = tpu.matmul %67, %54, %cst_23 {dimension_numbers = #tpu.dot_dimension_numbers<[2], [1], [1], [2], [0, 0, 0, 1, 1, 2], [0], [0]>} : vector<2x8x8xf32>, vector<2x8x16xf32>, vector<2x8x16xf32> -> vector<2x8x16xf32>
    "tpu.trace_stop"() : () -> ()
    %69 = vector.shape_cast %68 : vector<2x8x16xf32> to vector<16x16xf32>
    %70 = vector.extract_strided_slice %27 {offsets = [0, 32], sizes = [16, 16], strides = [1, 1]} : vector<16x128xf32> to vector<16x16xf32>
    %71 = vector.shape_cast %70 : vector<16x16xf32> to vector<2x8x16xf32>
    %72 = vector.extract_strided_slice %27 {offsets = [0, 96], sizes = [16, 16], strides = [1, 1]} : vector<16x128xf32> to vector<16x16xf32>
    %73 = vector.shape_cast %72 : vector<16x16xf32> to vector<2x8x16xf32>
    %74 = vector.extract_strided_slice %17 {offsets = [0, 32], sizes = [16, 16], strides = [1, 1]} : vector<16x64xf32> to vector<16x16xf32>
    %75 = vector.shape_cast %74 : vector<16x16xf32> to vector<2x8x16xf32>
    "tpu.trace_start"() <{level = 10 : i32, message = "bqd,bkd->bqk"}> : () -> ()
    %cst_24 = arith.constant dense<0.000000e+00> : vector<2x8x8xf32>
    %76 = tpu.matmul %71, %73, %cst_24 {dimension_numbers = #tpu.dot_dimension_numbers<[2], [2], [1], [1], [0, 0, 0, 1, 1, 1], [0], [0]>} : vector<2x8x16xf32>, vector<2x8x16xf32>, vector<2x8x8xf32> -> vector<2x8x8xf32>
    "tpu.trace_stop"() : () -> ()
    %cst_25 = arith.constant 2.500000e-01 : f32
    %77 = vector.broadcast %cst_25 : f32 to vector<2x8x8xf32>
    %78 = arith.mulf %76, %77 : vector<2x8x8xf32>
    %cst_26 = arith.constant dense<0xFF800000> : vector<2x8xf32>
    %79 = vector.multi_reduction <maximumf>, %78, %cst_26 [2] : vector<2x8x8xf32> to vector<2x8xf32>
    %80 = vector.shape_cast %79 : vector<2x8xf32> to vector<2x8x1xf32>
    %81 = vector.broadcast %80 : vector<2x8x1xf32> to vector<2x8x8xf32>
    %82 = arith.subf %78, %81 : vector<2x8x8xf32>
    %83 = math.exp %82 : vector<2x8x8xf32>
    %cst_27 = arith.constant dense<0.000000e+00> : vector<2x8xf32>
    %84 = vector.multi_reduction <add>, %83, %cst_27 [2] : vector<2x8x8xf32> to vector<2x8xf32>
    %85 = vector.shape_cast %84 : vector<2x8xf32> to vector<2x8x1xf32>
    %86 = tpu.reciprocal %85 {approx = true} : vector<2x8x1xf32> -> vector<2x8x1xf32>
    %87 = vector.broadcast %86 : vector<2x8x1xf32> to vector<2x8x8xf32>
    %88 = arith.mulf %83, %87 : vector<2x8x8xf32>
    "tpu.trace_start"() <{level = 10 : i32, message = "bqk,bkd->bqd"}> : () -> ()
    %cst_28 = arith.constant dense<0.000000e+00> : vector<2x8x16xf32>
    %89 = tpu.matmul %88, %75, %cst_28 {dimension_numbers = #tpu.dot_dimension_numbers<[2], [1], [1], [2], [0, 0, 0, 1, 1, 2], [0], [0]>} : vector<2x8x8xf32>, vector<2x8x16xf32>, vector<2x8x16xf32> -> vector<2x8x16xf32>
    "tpu.trace_stop"() : () -> ()
    %90 = vector.shape_cast %89 : vector<2x8x16xf32> to vector<16x16xf32>
    %91 = vector.extract_strided_slice %27 {offsets = [0, 48], sizes = [16, 16], strides = [1, 1]} : vector<16x128xf32> to vector<16x16xf32>
    %92 = vector.shape_cast %91 : vector<16x16xf32> to vector<2x8x16xf32>
    %93 = vector.extract_strided_slice %27 {offsets = [0, 112], sizes = [16, 16], strides = [1, 1]} : vector<16x128xf32> to vector<16x16xf32>
    %94 = vector.shape_cast %93 : vector<16x16xf32> to vector<2x8x16xf32>
    %95 = vector.extract_strided_slice %17 {offsets = [0, 48], sizes = [16, 16], strides = [1, 1]} : vector<16x64xf32> to vector<16x16xf32>
    %96 = vector.shape_cast %95 : vector<16x16xf32> to vector<2x8x16xf32>
    "tpu.trace_start"() <{level = 10 : i32, message = "bqd,bkd->bqk"}> : () -> ()
    %cst_29 = arith.constant dense<0.000000e+00> : vector<2x8x8xf32>
    %97 = tpu.matmul %92, %94, %cst_29 {dimension_numbers = #tpu.dot_dimension_numbers<[2], [2], [1], [1], [0, 0, 0, 1, 1, 1], [0], [0]>} : vector<2x8x16xf32>, vector<2x8x16xf32>, vector<2x8x8xf32> -> vector<2x8x8xf32>
    "tpu.trace_stop"() : () -> ()
    %cst_30 = arith.constant 2.500000e-01 : f32
    %98 = vector.broadcast %cst_30 : f32 to vector<2x8x8xf32>
    %99 = arith.mulf %97, %98 : vector<2x8x8xf32>
    %cst_31 = arith.constant dense<0xFF800000> : vector<2x8xf32>
    %100 = vector.multi_reduction <maximumf>, %99, %cst_31 [2] : vector<2x8x8xf32> to vector<2x8xf32>
    %101 = vector.shape_cast %100 : vector<2x8xf32> to vector<2x8x1xf32>
    %102 = vector.broadcast %101 : vector<2x8x1xf32> to vector<2x8x8xf32>
    %103 = arith.subf %99, %102 : vector<2x8x8xf32>
    %104 = math.exp %103 : vector<2x8x8xf32>
    %cst_32 = arith.constant dense<0.000000e+00> : vector<2x8xf32>
    %105 = vector.multi_reduction <add>, %104, %cst_32 [2] : vector<2x8x8xf32> to vector<2x8xf32>
    %106 = vector.shape_cast %105 : vector<2x8xf32> to vector<2x8x1xf32>
    %107 = tpu.reciprocal %106 {approx = true} : vector<2x8x1xf32> -> vector<2x8x1xf32>
    %108 = vector.broadcast %107 : vector<2x8x1xf32> to vector<2x8x8xf32>
    %109 = arith.mulf %104, %108 : vector<2x8x8xf32>
    "tpu.trace_start"() <{level = 10 : i32, message = "bqk,bkd->bqd"}> : () -> ()
    %cst_33 = arith.constant dense<0.000000e+00> : vector<2x8x16xf32>
    %110 = tpu.matmul %109, %96, %cst_33 {dimension_numbers = #tpu.dot_dimension_numbers<[2], [1], [1], [2], [0, 0, 0, 1, 1, 2], [0], [0]>} : vector<2x8x8xf32>, vector<2x8x16xf32>, vector<2x8x16xf32> -> vector<2x8x16xf32>
    "tpu.trace_stop"() : () -> ()
    %111 = vector.shape_cast %110 : vector<2x8x16xf32> to vector<16x16xf32>
    %112 = tpu.concatenate %48, %69, %90, %111 in 1 : vector<16x16xf32>, vector<16x16xf32>, vector<16x16xf32>, vector<16x16xf32> -> vector<16x64xf32>
    %c0_34 = arith.constant 0 : index
    %c0_35 = arith.constant 0 : index
    %113 = vector.load %arg4[%c0_34, %c0_35] : memref<64x64xf32, #tpu.memory_space<vmem>>, vector<64x64xf32>
    %cst_36 = arith.constant dense<0.000000e+00> : vector<16x64xf32>
    %114 = tpu.matmul %112, %113, %cst_36 {dimension_numbers = #tpu.dot_dimension_numbers<[1], [0], [0], [1], [0, 0, 1, 1], [], []>} : vector<16x64xf32>, vector<64x64xf32>, vector<16x64xf32> -> vector<16x64xf32>
    %115 = arith.addf %0, %114 : vector<16x64xf32>
    %116 = arith.mulf %115, %115 : vector<16x64xf32>
    %cst_37 = arith.constant dense<0.000000e+00> : vector<16xf32>
    %117 = vector.multi_reduction <add>, %116, %cst_37 [1] : vector<16x64xf32> to vector<16xf32>
    %118 = vector.shape_cast %117 : vector<16xf32> to vector<16x1xf32>
    %cst_38 = arith.constant 6.400000e+01 : f32
    %119 = vector.broadcast %cst_38 : f32 to vector<16x1xf32>
    %120 = arith.divf %118, %119 : vector<16x1xf32>
    %cst_39 = arith.constant 9.99999974E-6 : f32
    %121 = vector.broadcast %cst_39 : f32 to vector<16x1xf32>
    %122 = arith.addf %120, %121 : vector<16x1xf32>
    %123 = math.rsqrt %122 : vector<16x1xf32>
    %124 = vector.broadcast %123 : vector<16x1xf32> to vector<16x64xf32>
    %125 = arith.mulf %115, %124 : vector<16x64xf32>
    %c0_40 = arith.constant 0 : index
    %c0_41 = arith.constant 0 : index
    %126 = vector.load %arg2[%c0_40, %c0_41] : memref<1x64xf32, #tpu.memory_space<vmem>>, vector<1x64xf32>
    %127 = vector.broadcast %126 : vector<1x64xf32> to vector<16x64xf32>
    %128 = arith.mulf %125, %127 : vector<16x64xf32>
    %c0_42 = arith.constant 0 : index
    %c0_43 = arith.constant 0 : index
    %129 = vector.load %arg5[%c0_42, %c0_43] : memref<64x384xf32, #tpu.memory_space<vmem>>, vector<64x384xf32>
    %cst_44 = arith.constant dense<0.000000e+00> : vector<16x384xf32>
    %130 = tpu.matmul %128, %129, %cst_44 {dimension_numbers = #tpu.dot_dimension_numbers<[1], [0], [0], [1], [0, 0, 1, 1], [], []>} : vector<16x64xf32>, vector<64x384xf32>, vector<16x384xf32> -> vector<16x384xf32>
    %131 = vector.extract_strided_slice %130 {offsets = [0, 0], sizes = [16, 192], strides = [1, 1]} : vector<16x384xf32> to vector<16x192xf32>
    %132 = vector.extract_strided_slice %130 {offsets = [0, 192], sizes = [16, 192], strides = [1, 1]} : vector<16x384xf32> to vector<16x192xf32>
    %133 = arith.negf %131 : vector<16x192xf32>
    %134 = math.exp %133 : vector<16x192xf32>
    %cst_45 = arith.constant 1.000000e+00 : f32
    %135 = vector.broadcast %cst_45 : f32 to vector<16x192xf32>
    %136 = arith.addf %135, %134 : vector<16x192xf32>
    %137 = arith.divf %135, %136 : vector<16x192xf32>
    %138 = arith.mulf %131, %137 : vector<16x192xf32>
    %139 = arith.mulf %138, %132 : vector<16x192xf32>
    %c0_46 = arith.constant 0 : index
    %c0_47 = arith.constant 0 : index
    %140 = vector.load %arg6[%c0_46, %c0_47] : memref<192x64xf32, #tpu.memory_space<vmem>>, vector<192x64xf32>
    %cst_48 = arith.constant dense<0.000000e+00> : vector<16x64xf32>
    %141 = tpu.matmul %139, %140, %cst_48 {dimension_numbers = #tpu.dot_dimension_numbers<[1], [0], [0], [1], [0, 0, 1, 1], [], []>} : vector<16x192xf32>, vector<192x64xf32>, vector<16x64xf32> -> vector<16x64xf32>
    %142 = arith.addf %115, %141 : vector<16x64xf32>
    %c0_49 = arith.constant 0 : index
    %c0_50 = arith.constant 0 : index
    %143 = vector.load %arg10[%c0_49, %c0_50] : memref<16x64xf32, #tpu.memory_space<vmem>>, vector<16x64xf32>
    tpu.vector_store %arg10[%c0_49, %c0_50], %142 {strides = array<i32>} : memref<16x64xf32, #tpu.memory_space<vmem>>, vector<16x64xf32>,
    return
  }
}

</mosaic_0001>

<llo_original>
// kernel: encoder_block.1
$region0: #{encoder_block.1}
  #allocation0 [shape = 'u32[]', space=smem, size = 0x4, offset = 0x4, fixed_abs, tag = 'smem constant byte address 0x4 - core index']
  #allocation1 [shape = 'u32[72,128]{1,0:T(1,128)}', space=vmem, size = 0x9000, scoped, tag = 'internal scratch']
  %s0 = inlined_call_operand.hbm [shape: f32[16,64], index: 0, kind: input, shape index: {}]
  %s1 = inlined_call_operand.vmem [shape: f32[1,64], index: 1, kind: input, shape index: {}]
  %s2 = inlined_call_operand.vmem [shape: f32[1,64], index: 2, kind: input, shape index: {}]
  %s3 = inlined_call_operand.vmem [shape: f32[64,192], index: 3, kind: input, shape index: {}]
  %s4 = inlined_call_operand.hbm [shape: f32[64,64], index: 4, kind: input, shape index: {}]
  %s5 = inlined_call_operand.vmem [shape: f32[64,384], index: 5, kind: input, shape index: {}]
  %s6 = inlined_call_operand.vmem [shape: f32[192,64], index: 6, kind: input, shape index: {}]
  %s7 = inlined_call_operand.hbm [shape: f32[16,128], index: 7, kind: input, shape index: {}]
  %s8 = inlined_call_operand.hbm [shape: f32[16,128], index: 8, kind: input, shape index: {}]
  %s9 = inlined_call_operand.hbm [shape: f32[16,128], index: 9, kind: input, shape index: {}]
  %s10 = inlined_call_operand.hbm [shape: f32[16,64], index: 10, kind: output, shape index: {}]
  %s11 = sld [smem:[#allocation0]]
  $region70: #{encoder_block.1} parent=0
    _
  %s13 = ssub.s32 1, %s11
  %s14 = scalar_select 0, %s13, %s11
  $region1: #{encoder_block.1} parent=0
    #allocation2 [shape = 'u8[8192]{0}', space=vmem, size = 0x2000, scoped, tag = 'input window, operand 0, single buffered']
    #allocation3 [shape = 's32[1]{0}', space=sflag, size = 0x4, scoped, tag = 'scoped memory for encoder_block.1']
    #allocation4 [shape = 's32[1]{0}', space=sflag, size = 0x4, scoped, tag = 'scoped memory for encoder_block.1']
    #allocation5 [shape = 'u8[32768]{0}', space=vmem, size = 0x8000, scoped, tag = 'input window, operand 4, single buffered']
    #allocation6 [shape = 's32[1]{0}', space=sflag, size = 0x4, scoped, tag = 'scoped memory for encoder_block.1']
    #allocation7 [shape = 'u8[8192]{0}', space=vmem, size = 0x2000, scoped, tag = 'input window, operand 7, single buffered']
    #allocation8 [shape = 'u8[8192]{0}', space=vmem, size = 0x2000, scoped, tag = 'input window, operand 8, single buffered']
    #allocation9 [shape = 's32[1]{0}', space=sflag, size = 0x4, scoped, tag = 'scoped memory for encoder_block.1']
    #allocation10 [shape = 'u8[8192]{0}', space=vmem, size = 0x2000, scoped, tag = 'input window, operand 9, single buffered']
    #allocation11 [shape = 'u8[8192]{0}', space=vmem, size = 0x2000, scoped, tag = 'output window, operand 0, single buffered']
    %15 = vsyncpa [#allocation3], 0
    %16 = vsyncpa [#allocation6], 0
    %17 = vsyncpa [#allocation9], 0
    %18 = vsyncpa [#allocation4], 0
    // Predicated region
    $region2: #{encoder_block.1} parent=1 // pred_check
      _
    $region3: #{encoder_block.1} parent=1 // pred_check_branch
      %20 = sbr.rel (0) target = $region5
    $region4: #{encoder_block.1} parent=1 // pred_region
      %22 = vsyncadd [#allocation3], 0
      %s23 = sshll.u32 %s0, 4
      %s24 = int_to_ptr.hbm [resolvable:$true] %s23
      %s25 = sshll.u32 [#allocation2], 4
      %s26 = int_to_ptr.vmem [resolvable:$true] %s25
      %31 = dma.hbm_to_vmem [thread:$0]  %s24, 256, %s26, [#allocation3], 128, 128, 8
    $region5: #{encoder_block.1} parent=1 // pred_fallthru
      _
    // Predicated region
    $region6: #{encoder_block.1} parent=1 // pred_check
      _
    $region7: #{encoder_block.1} parent=1 // pred_check_branch
      %33 = sbr.rel (0) target = $region9
    $region8: #{encoder_block.1} parent=1 // pred_region
      _
    $region9: #{encoder_block.1} parent=1 // pred_fallthru
      _
    // Predicated region
    $region10: #{encoder_block.1} parent=1 // pred_check
      _
    $region11: #{encoder_block.1} parent=1 // pred_check_branch
      %35 = sbr.rel (0) target = $region13
    $region12: #{encoder_block.1} parent=1 // pred_region
      _
    $region13: #{encoder_block.1} parent=1 // pred_fallthru
      _
    // Predicated region
    $region14: #{encoder_block.1} parent=1 // pred_check
      _
    $region15: #{encoder_block.1} parent=1 // pred_check_branch
      %37 = sbr.rel (0) target = $region17
    $region16: #{encoder_block.1} parent=1 // pred_region
      _
    $region17: #{encoder_block.1} parent=1 // pred_fallthru
      _
    // Predicated region
    $region18: #{encoder_block.1} parent=1 // pred_check
      _
    $region19: #{encoder_block.1} parent=1 // pred_check_branch
      %39 = sbr.rel (0) target = $region21
    $region20: #{encoder_block.1} parent=1 // pred_region
      %41 = vsyncadd [#allocation6], 0
      %s42 = sshll.u32 %s4, 4
      %s43 = int_to_ptr.hbm [resolvable:$true] %s42
      %s44 = sshll.u32 [#allocation5], 4
      %s45 = int_to_ptr.vmem [resolvable:$true] %s44
      %50 = dma.hbm_to_vmem [thread:$0]  %s43, 1024, %s45, [#allocation6], 128, 128, 8
    $region21: #{encoder_block.1} parent=1 // pred_fallthru
      _
    // Predicated region
    $region22: #{encoder_block.1} parent=1 // pred_check
      _
    $region23: #{encoder_block.1} parent=1 // pred_check_branch
      %52 = sbr.rel (0) target = $region25
    $region24: #{encoder_block.1} parent=1 // pred_region
      _
    $region25: #{encoder_block.1} parent=1 // pred_fallthru
      _
    // Predicated region
    $region26: #{encoder_block.1} parent=1 // pred_check
      _
    $region27: #{encoder_block.1} parent=1 // pred_check_branch
      %54 = sbr.rel (0) target = $region29
    $region28: #{encoder_block.1} parent=1 // pred_region
      _
    $region29: #{encoder_block.1} parent=1 // pred_fallthru
      _
    // Predicated region
    $region30: #{encoder_block.1} parent=1 // pred_check
      _
    $region31: #{encoder_block.1} parent=1 // pred_check_branch
      %56 = sbr.rel (0) target = $region33
    $region32: #{encoder_block.1} parent=1 // pred_region
      %58 = vsyncadd [#allocation6], 0
      %s59 = sshll.u32 %s7, 4
      %s60 = int_to_ptr.hbm [resolvable:$true] %s59
      %s61 = sshll.u32 [#allocation7], 4
      %s62 = int_to_ptr.vmem [resolvable:$true] %s61
      %67 = dma.hbm_to_vmem [thread:$0]  %s60, 256, %s62, [#allocation6], 128, 128, 8
    $region33: #{encoder_block.1} parent=1 // pred_fallthru
      _
    // Predicated region
    $region34: #{encoder_block.1} parent=1 // pred_check
      _
    $region35: #{encoder_block.1} parent=1 // pred_check_branch
      %69 = sbr.rel (0) target = $region37
    $region36: #{encoder_block.1} parent=1 // pred_region
      %71 = vsyncadd [#allocation9], 0
      %s72 = sshll.u32 %s8, 4
      %s73 = int_to_ptr.hbm [resolvable:$true] %s72
      %s74 = sshll.u32 [#allocation8], 4
      %s75 = int_to_ptr.vmem [resolvable:$true] %s74
      %80 = dma.hbm_to_vmem [thread:$0]  %s73, 256, %s75, [#allocation9], 128, 128, 8
    $region37: #{encoder_block.1} parent=1 // pred_fallthru
      _
    // Predicated region
    $region38: #{encoder_block.1} parent=1 // pred_check
      _
    $region39: #{encoder_block.1} parent=1 // pred_check_branch
      %82 = sbr.rel (0) target = $region41
    $region40: #{encoder_block.1} parent=1 // pred_region
      %84 = vsyncadd [#allocation9], 0
      %s85 = sshll.u32 %s9, 4
      %s86 = int_to_ptr.hbm [resolvable:$true] %s85
      %s87 = sshll.u32 [#allocation10], 4
      %s88 = int_to_ptr.vmem [resolvable:$true] %s87
      %93 = dma.hbm_to_vmem [thread:$0]  %s86, 256, %s88, [#allocation9], 128, 128, 8
    $region41: #{encoder_block.1} parent=1 // pred_fallthru
      _
    // Predicated region
    $region42: #{encoder_block.1} parent=1 // pred_check
      _
    $region43: #{encoder_block.1} parent=1 // pred_check_branch
      %95 = sbr.rel (0) target = $region45
    $region44: #{encoder_block.1} parent=1 // pred_region
      %97 = dma.done [#allocation3], 256
    $region45: #{encoder_block.1} parent=1 // pred_fallthru
      _
    // Predicated region
    $region46: #{encoder_block.1} parent=1 // pred_check
      _
    $region47: #{encoder_block.1} parent=1 // pred_check_branch
      %99 = sbr.rel (0) target = $region49
    $region48: #{encoder_block.1} parent=1 // pred_region
      %101 = dma.done [#allocation6], 1024
    $region49: #{encoder_block.1} parent=1 // pred_fallthru
      _
    // Predicated region
    $region50: #{encoder_block.1} parent=1 // pred_check
      _
    $region51: #{encoder_block.1} parent=1 // pred_check_branch
      %103 = sbr.rel (0) target = $region53
    $region52: #{encoder_block.1} parent=1 // pred_region
      %105 = dma.done [#allocation6], 256
    $region53: #{encoder_block.1} parent=1 // pred_fallthru
      _
    // Predicated region
    $region54: #{encoder_block.1} parent=1 // pred_check
      _
    $region55: #{encoder_block.1} parent=1 // pred_check_branch
      %107 = sbr.rel (0) target = $region57
    $region56: #{encoder_block.1} parent=1 // pred_region
      %109 = dma.done [#allocation9], 256
    $region57: #{encoder_block.1} parent=1 // pred_fallthru
      _
    // Predicated region
    $region58: #{encoder_block.1} parent=1 // pred_check
      _
    $region59: #{encoder_block.1} parent=1 // pred_check_branch
      %111 = sbr.rel (0) target = $region61
    $region60: #{encoder_block.1} parent=1 // pred_region
      %113 = dma.done [#allocation9], 256
    $region61: #{encoder_block.1} parent=1 // pred_fallthru
      _
    %v114 = vld [vmem:[#allocation2] sm:$0xff]
    %v115 = vld [vmem:[#allocation2 + $0x8] sm:$0xff]
    %v116 = vmul.f32 %v114, %v114
    %v117 = vmul.f32 %v115, %v115
    %vm118 = vcmask 523264
    %v119 = vsel %vm118, %v116, 0.0
    %120 = vadd.xlane.f32.xlu0 %v119
    %v121 = vpop.xlane.xlu0 %120
    %v122 = vsel %vm118, %v117, 0.0
    %123 = vadd.xlane.f32.xlu0 %v122
    %v124 = vpop.xlane.xlu0 %123
    %v125 = vrcp.pop 64.0
    %v126 = vmul.f32 64.0, %v125
    %v127 = vsub.f32 1.0, %v126
    %v128 = vmul.f32 %v125, %v127
    %v129 = vadd.f32 %v125, %v128
    %vm130 = vweird.f32 %v125
    %v131 = vsel %vm130, %v125, %v129
    %v132 = vmul.f32 %v121, %v131
    %v133 = vmul.f32 %v124, %v131
    %v134 = vadd.f32 %v132, 1e-05
    %v135 = vadd.f32 %v133, 1e-05
    %v136 = vrsqrt.pop %v134
    %v137 = vmul.f32 %v136, %v134
    %v138 = vmul.f32 %v137, %v136
    %v139 = vmul.f32 0.5, %v138
    %v140 = vsub.f32 1.5, %v139
    %v141 = vmul.f32 %v136, %v140
    %vm142 = vweird.f32 %v134
    %vm143 = vweird.f32 %v136
    %vm144 = vmor %vm142, %vm143
    %v145 = vsel %vm144, %v136, %v141
    %v146 = vrsqrt.pop %v135
    %v147 = vmul.f32 %v146, %v135
    %v148 = vmul.f32 %v147, %v146
    %v149 = vmul.f32 0.5, %v148
    %v150 = vsub.f32 1.5, %v149
    %v151 = vmul.f32 %v146, %v150
    %vm152 = vweird.f32 %v135
    %vm153 = vweird.f32 %v146
    %vm154 = vmor %vm152, %vm153
    %v155 = vsel %vm154, %v146, %v151
    %v156 = vmul.f32 %v114, %v145
    %v157 = vmul.f32 %v115, %v155
    %v158 = vld [vmem:[%s1] sm:$0x1]
    %v160 = vperm.slane %v158, 0
    %v162 = vmul.f32 %v156, %v160
    %v163 = vmul.f32 %v157, %v160
    %v164 = vld [vmem:[%s3] sm:$0xff]
    %v165 = vld [vmem:[%s3 + $0x8] sm:$0xff]
    %v166 = vld [vmem:[%s3 + $0x10] sm:$0xff]
    %v167 = vld [vmem:[%s3 + $0x18] sm:$0xff]
    %v168 = vld [vmem:[%s3 + $0x20] sm:$0xff]
    %v169 = vld [vmem:[%s3 + $0x28] sm:$0xff]
    %v170 = vld [vmem:[%s3 + $0x30] sm:$0xff]
    %v171 = vld [vmem:[%s3 + $0x38] sm:$0xff]
    %v172 = vld [vmem:[%s3 + $0x40] sm:$0xff]
    %v173 = vld [vmem:[%s3 + $0x48] sm:$0xff]
    %v174 = vld [vmem:[%s3 + $0x50] sm:$0xff]
    %v175 = vld [vmem:[%s3 + $0x58] sm:$0xff]
    %v176 = vld [vmem:[%s3 + $0x60] sm:$0xff]
    %v177 = vld [vmem:[%s3 + $0x68] sm:$0xff]
    %v178 = vld [vmem:[%s3 + $0x70] sm:$0xff]
    %v179 = vld [vmem:[%s3 + $0x78] sm:$0xff]
    %v181 = vsel %vm118, %v162, 0
    %v184 = vsel %vm118, %v163, 0
    %186 = vmatpush.msra.mxu0 0.0
    %187 = vmatpush.msra.mxu0 0.0
    %188 = vmatpush.msra.mxu0 0.0
    %189 = vmatpush.msra.mxu0 0.0
    %190 = vmatpush.msra.mxu0 0.0
    %191 = vmatpush.msra.mxu0 0.0
    %192 = vmatpush.msra.mxu0 0.0
    %193 = vmatpush.msra.mxu0 0.0
    %194 = vmatpush.msra.mxu0 %v178
    %195 = vmatpush.msra.mxu0 %v176
    %196 = vmatpush.msra.mxu0 %v174
    %197 = vmatpush.msra.mxu0 %v172
    %198 = vmatpush.msra.mxu0 %v170
    %199 = vmatpush.msra.mxu0 %v168
    %200 = vmatpush.msra.mxu0 %v166
    %201 = vmatpush.msra.mxu0 %v164
    %202 = vmatmul.f32.gmra.mxu0 %v181
    %v203 = vpop.f32.mrf.mxu0
    %v204 = vadd.f32 0.0, %v203
    %205 = vmatmul.f32.gmra.mxu0 %v184
    %v206 = vpop.f32.mrf.mxu0
    %v207 = vadd.f32 0.0, %v206
    %208 = vdwg.mxu0
    %209 = vmatpush.msra.mxu0 0.0
    %210 = vmatpush.msra.mxu0 0.0
    %211 = vmatpush.msra.mxu0 0.0
    %212 = vmatpush.msra.mxu0 0.0
    %213 = vmatpush.msra.mxu0 0.0
    %214 = vmatpush.msra.mxu0 0.0
    %215 = vmatpush.msra.mxu0 0.0
    %216 = vmatpush.msra.mxu0 0.0
    %217 = vmatpush.msra.mxu0 %v179
    %218 = vmatpush.msra.mxu0 %v177
    %219 = vmatpush.msra.mxu0 %v175
    %220 = vmatpush.msra.mxu0 %v173
    %221 = vmatpush.msra.mxu0 %v171
    %222 = vmatpush.msra.mxu0 %v169
    %223 = vmatpush.msra.mxu0 %v167
    %224 = vmatpush.msra.mxu0 %v165
    %225 = vmatmul.f32.gmra.mxu0 %v181
    %v226 = vpop.f32.mrf.mxu0
    %v227 = vadd.f32 0.0, %v226
    %228 = vmatmul.f32.gmra.mxu0 %v184
    %v229 = vpop.f32.mrf.mxu0
    %v230 = vadd.f32 0.0, %v229
    %231 = vdwg.mxu0
    %232 = vrot.lane.b32.xlu0 %v204, 127
    %v233 = vpop.permute.xlu0 %232
    %234 = vrot.lane.b32.xlu0 %v207, 127
    %v235 = vpop.permute.xlu0 %234
    %236 = vrot.lane.b32.xlu0 %v204, 1
    %v237 = vpop.permute.xlu0 %236
    %238 = vrot.lane.b32.xlu0 %v207, 1
    %v239 = vpop.permute.xlu0 %238
    %v240 = vld [vmem:[#allocation7] sm:$0xff]
    %v241 = vld [vmem:[#allocation7 + $0x8] sm:$0xff]
    %v242 = vmul.f32 %v204, %v240
    %v243 = vmul.f32 %v207, %v241
    %v244 = vld [vmem:[#allocation8] sm:$0xff]
    %v245 = vld [vmem:[#allocation8 + $0x8] sm:$0xff]
    %v246 = vmul.f32 %v233, %v244
    %v247 = vmul.f32 %v235, %v245
    %v248 = vadd.f32 %v242, %v246
    %v249 = vadd.f32 %v243, %v247
    %v250 = vld [vmem:[#allocation10] sm:$0xff]
    %v251 = vld [vmem:[#allocation10 + $0x8] sm:$0xff]
    %v252 = vmul.f32 %v237, %v250
    %v253 = vmul.f32 %v239, %v251
    %v254 = vadd.f32 %v248, %v252
    %v255 = vadd.f32 %v249, %v253
    %257 = vrot.lane.b32.xlu0 %v254, 64
    %v258 = vpop.permute.xlu0 %257
    %vm259 = vcmask 130048
    %v260 = vsel %vm259, %v254, 0
    %v262 = vsel %vm259, %v258, 0
    %264 = vmatpush.xpose.msra.mxu0 0.0
    %265 = vmatpush.xpose.msra.mxu0 0.0
    %266 = vmatpush.xpose.msra.mxu0 0.0
    %267 = vmatpush.xpose.msra.mxu0 0.0
    %268 = vmatpush.xpose.msra.mxu0 0.0
    %269 = vmatpush.xpose.msra.mxu0 0.0
    %270 = vmatpush.xpose.msra.mxu0 0.0
    %271 = vmatpush.xpose.msra.mxu0 0.0
    %272 = vmatpush.xpose.msra.mxu0 0.0
    %273 = vmatpush.xpose.msra.mxu0 0.0
    %274 = vmatpush.xpose.msra.mxu0 0.0
    %275 = vmatpush.xpose.msra.mxu0 0.0
    %276 = vmatpush.xpose.msra.mxu0 0.0
    %277 = vmatpush.xpose.msra.mxu0 0.0
    %278 = vmatpush.xpose.msra.mxu0 0.0
    %279 = vmatpush.xpose.msra.mxu0 %v262
    %280 = vmatmul.f32.gmra.mxu0 %v260
    %v281 = vpop.f32.mrf.mxu0
    %v282 = vadd.f32 0.0, %v281
    %283 = vdwg.mxu0
    %285 = vrot.lane.b32.xlu0 %v255, 64
    %v286 = vpop.permute.xlu0 %285
    %v287 = vsel %vm259, %v255, 0
    %v289 = vsel %vm259, %v286, 0
    %291 = vmatpush.xpose.msra.mxu0 0.0
    %292 = vmatpush.xpose.msra.mxu0 0.0
    %293 = vmatpush.xpose.msra.mxu0 0.0
    %294 = vmatpush.xpose.msra.mxu0 0.0
    %295 = vmatpush.xpose.msra.mxu0 0.0
    %296 = vmatpush.xpose.msra.mxu0 0.0
    %297 = vmatpush.xpose.msra.mxu0 0.0
    %298 = vmatpush.xpose.msra.mxu0 0.0
    %299 = vmatpush.xpose.msra.mxu0 0.0
    %300 = vmatpush.xpose.msra.mxu0 0.0
    %301 = vmatpush.xpose.msra.mxu0 0.0
    %302 = vmatpush.xpose.msra.mxu0 0.0
    %303 = vmatpush.xpose.msra.mxu0 0.0
    %304 = vmatpush.xpose.msra.mxu0 0.0
    %305 = vmatpush.xpose.msra.mxu0 0.0
    %306 = vmatpush.xpose.msra.mxu0 %v289
    %307 = vmatmul.f32.gmra.mxu0 %v287
    %v308 = vpop.f32.mrf.mxu0
    %v309 = vadd.f32 0.0, %v308
    %310 = vdwg.mxu0
    %v311 = vmul.f32 %v282, 0.25
    %v312 = vmul.f32 %v309, 0.25
    %vm313 = vcmask 64512
    %v314 = vsel %vm313, %v311, -inf
    %315 = vmax.xlane.f32.xlu0 %v314
    %v316 = vpop.xlane.xlu0 %315
    %v317 = vsel %vm313, %v312, -inf
    %318 = vmax.xlane.f32.xlu0 %v317
    %v319 = vpop.xlane.xlu0 %318
    %v320 = vsub.f32 %v311, %v316
    %v321 = vsub.f32 %v312, %v319
    %v322 = vmul.f32 %v320, 1.442695
    %v323 = vpow.pop %v322
    %v324 = vmul.f32 %v321, 1.442695
    %v325 = vpow.pop %v324
    %v326 = vsel %vm313, %v323, 0.0
    %327 = vadd.xlane.f32.xlu0 %v326
    %v328 = vpop.xlane.xlu0 %327
    %v329 = vsel %vm313, %v325, 0.0
    %330 = vadd.xlane.f32.xlu0 %v329
    %v331 = vpop.xlane.xlu0 %330
    %v332 = vrcp.pop %v328
    %v333 = vrcp.pop %v331
    %v334 = vmul.f32 %v323, %v332
    %v335 = vmul.f32 %v325, %v333
    %v337 = vsel %vm313, %v334, 0
    %339 = vmatpush.msra.mxu0 0.0
    %340 = vmatpush.msra.mxu0 0.0
    %341 = vmatpush.msra.mxu0 0.0
    %342 = vmatpush.msra.mxu0 0.0
    %343 = vmatpush.msra.mxu0 0.0
    %344 = vmatpush.msra.mxu0 0.0
    %345 = vmatpush.msra.mxu0 0.0
    %346 = vmatpush.msra.mxu0 0.0
    %347 = vmatpush.msra.mxu0 0.0
    %348 = vmatpush.msra.mxu0 0.0
    %349 = vmatpush.msra.mxu0 0.0
    %350 = vmatpush.msra.mxu0 0.0
    %351 = vmatpush.msra.mxu0 0.0
    %352 = vmatpush.msra.mxu0 0.0
    %353 = vmatpush.msra.mxu0 0.0
    %354 = vmatpush.msra.mxu0 %v227
    %355 = vmatmul.f32.gmra.mxu0 %v337
    %v356 = vpop.f32.mrf.mxu0
    %v357 = vadd.f32 0.0, %v356
    %358 = vdwg.mxu0
    %v360 = vsel %vm313, %v335, 0
    %362 = vmatpush.msra.mxu0 0.0
    %363 = vmatpush.msra.mxu0 0.0
    %364 = vmatpush.msra.mxu0 0.0
    %365 = vmatpush.msra.mxu0 0.0
    %366 = vmatpush.msra.mxu0 0.0
    %367 = vmatpush.msra.mxu0 0.0
    %368 = vmatpush.msra.mxu0 0.0
    %369 = vmatpush.msra.mxu0 0.0
    %370 = vmatpush.msra.mxu0 0.0
    %371 = vmatpush.msra.mxu0 0.0
    %372 = vmatpush.msra.mxu0 0.0
    %373 = vmatpush.msra.mxu0 0.0
    %374 = vmatpush.msra.mxu0 0.0
    %375 = vmatpush.msra.mxu0 0.0
    %376 = vmatpush.msra.mxu0 0.0
    %377 = vmatpush.msra.mxu0 %v230
    %378 = vmatmul.f32.gmra.mxu0 %v360
    %v379 = vpop.f32.mrf.mxu0
    %v380 = vadd.f32 0.0, %v379
    %381 = vdwg.mxu0
    %382 = vrot.lane.b32.xlu0 %v254, 112
    %v383 = vpop.permute.xlu0 %382
    %384 = vrot.lane.b32.xlu0 %v254, 48
    %v385 = vpop.permute.xlu0 %384
    %v386 = vsel %vm259, %v383, 0
    %v388 = vsel %vm259, %v385, 0
    %390 = vmatpush.xpose.msra.mxu0 0.0
    %391 = vmatpush.xpose.msra.mxu0 0.0
    %392 = vmatpush.xpose.msra.mxu0 0.0
    %393 = vmatpush.xpose.msra.mxu0 0.0
    %394 = vmatpush.xpose.msra.mxu0 0.0
    %395 = vmatpush.xpose.msra.mxu0 0.0
    %396 = vmatpush.xpose.msra.mxu0 0.0
    %397 = vmatpush.xpose.msra.mxu0 0.0
    %398 = vmatpush.xpose.msra.mxu0 0.0
    %399 = vmatpush.xpose.msra.mxu0 0.0
    %400 = vmatpush.xpose.msra.mxu0 0.0
    %401 = vmatpush.xpose.msra.mxu0 0.0
    %402 = vmatpush.xpose.msra.mxu0 0.0
    %403 = vmatpush.xpose.msra.mxu0 0.0
    %404 = vmatpush.xpose.msra.mxu0 0.0
    %405 = vmatpush.xpose.msra.mxu0 %v388
    %406 = vmatmul.f32.gmra.mxu0 %v386
    %v407 = vpop.f32.mrf.mxu0
    %v408 = vadd.f32 0.0, %v407
    %409 = vdwg.mxu0
    %410 = vrot.lane.b32.xlu0 %v255, 112
    %v411 = vpop.permute.xlu0 %410
    %412 = vrot.lane.b32.xlu0 %v255, 48
    %v413 = vpop.permute.xlu0 %412
    %v414 = vsel %vm259, %v411, 0
    %v416 = vsel %vm259, %v413, 0
    %418 = vmatpush.xpose.msra.mxu0 0.0
    %419 = vmatpush.xpose.msra.mxu0 0.0
    %420 = vmatpush.xpose.msra.mxu0 0.0
    %421 = vmatpush.xpose.msra.mxu0 0.0
    %422 = vmatpush.xpose.msra.mxu0 0.0
    %423 = vmatpush.xpose.msra.mxu0 0.0
    %424 = vmatpush.xpose.msra.mxu0 0.0
    %425 = vmatpush.xpose.msra.mxu0 0.0
    %426 = vmatpush.xpose.msra.mxu0 0.0
    %427 = vmatpush.xpose.msra.mxu0 0.0
    %428 = vmatpush.xpose.msra.mxu0 0.0
    %429 = vmatpush.xpose.msra.mxu0 0.0
    %430 = vmatpush.xpose.msra.mxu0 0.0
    %431 = vmatpush.xpose.msra.mxu0 0.0
    %432 = vmatpush.xpose.msra.mxu0 0.0
    %433 = vmatpush.xpose.msra.mxu0 %v416
    %434 = vmatmul.f32.gmra.mxu0 %v414
    %v435 = vpop.f32.mrf.mxu0
    %v436 = vadd.f32 0.0, %v435
    %437 = vdwg.mxu0
    %v438 = vmul.f32 %v408, 0.25
    %v439 = vmul.f32 %v436, 0.25
    %v440 = vsel %vm313, %v438, -inf
    %441 = vmax.xlane.f32.xlu0 %v440
    %v442 = vpop.xlane.xlu0 %441
    %v443 = vsel %vm313, %v439, -inf
    %444 = vmax.xlane.f32.xlu0 %v443
    %v445 = vpop.xlane.xlu0 %444
    %v446 = vsub.f32 %v438, %v442
    %v447 = vsub.f32 %v439, %v445
    %v448 = vmul.f32 %v446, 1.442695
    %v449 = vpow.pop %v448
    %v450 = vmul.f32 %v447, 1.442695
    %v451 = vpow.pop %v450
    %v452 = vsel %vm313, %v449, 0.0
    %453 = vadd.xlane.f32.xlu0 %v452
    %v454 = vpop.xlane.xlu0 %453
    %v455 = vsel %vm313, %v451, 0.0
    %456 = vadd.xlane.f32.xlu0 %v455
    %v457 = vpop.xlane.xlu0 %456
    %v458 = vrcp.pop %v454
    %v459 = vrcp.pop %v457
    %v460 = vmul.f32 %v449, %v458
    %v461 = vmul.f32 %v451, %v459
    %463 = vrot.lane.b32.xlu0 %v227, 112
    %v464 = vpop.permute.xlu0 %463
    %v467 = vsel %vm313, %v460, 0
    %469 = vmatpush.msra.mxu0 0.0
    %470 = vmatpush.msra.mxu0 0.0
    %471 = vmatpush.msra.mxu0 0.0
    %472 = vmatpush.msra.mxu0 0.0
    %473 = vmatpush.msra.mxu0 0.0
    %474 = vmatpush.msra.mxu0 0.0
    %475 = vmatpush.msra.mxu0 0.0
    %476 = vmatpush.msra.mxu0 0.0
    %477 = vmatpush.msra.mxu0 0.0
    %478 = vmatpush.msra.mxu0 0.0
    %479 = vmatpush.msra.mxu0 0.0
    %480 = vmatpush.msra.mxu0 0.0
    %481 = vmatpush.msra.mxu0 0.0
    %482 = vmatpush.msra.mxu0 0.0
    %483 = vmatpush.msra.mxu0 0.0
    %484 = vmatpush.msra.mxu0 %v464
    %485 = vmatmul.f32.gmra.mxu0 %v467
    %v486 = vpop.f32.mrf.mxu0
    %v487 = vadd.f32 0.0, %v486
    %488 = vdwg.mxu0
    %490 = vrot.lane.b32.xlu0 %v230, 112
    %v491 = vpop.permute.xlu0 %490
    %v494 = vsel %vm313, %v461, 0
    %496 = vmatpush.msra.mxu0 0.0
    %497 = vmatpush.msra.mxu0 0.0
    %498 = vmatpush.msra.mxu0 0.0
    %499 = vmatpush.msra.mxu0 0.0
    %500 = vmatpush.msra.mxu0 0.0
    %501 = vmatpush.msra.mxu0 0.0
    %502 = vmatpush.msra.mxu0 0.0
    %503 = vmatpush.msra.mxu0 0.0
    %504 = vmatpush.msra.mxu0 0.0
    %505 = vmatpush.msra.mxu0 0.0
    %506 = vmatpush.msra.mxu0 0.0
    %507 = vmatpush.msra.mxu0 0.0
    %508 = vmatpush.msra.mxu0 0.0
    %509 = vmatpush.msra.mxu0 0.0
    %510 = vmatpush.msra.mxu0 0.0
    %511 = vmatpush.msra.mxu0 %v491
    %512 = vmatmul.f32.gmra.mxu0 %v494
    %v513 = vpop.f32.mrf.mxu0
    %v514 = vadd.f32 0.0, %v513
    %515 = vdwg.mxu0
    %516 = vrot.lane.b32.xlu0 %v254, 96
    %v517 = vpop.permute.xlu0 %516
    %518 = vrot.lane.b32.xlu0 %v254, 32
    %v519 = vpop.permute.xlu0 %518
    %v520 = vsel %vm259, %v517, 0
    %v522 = vsel %vm259, %v519, 0
    %524 = vmatpush.xpose.msra.mxu0 0.0
    %525 = vmatpush.xpose.msra.mxu0 0.0
    %526 = vmatpush.xpose.msra.mxu0 0.0
    %527 = vmatpush.xpose.msra.mxu0 0.0
    %528 = vmatpush.xpose.msra.mxu0 0.0
    %529 = vmatpush.xpose.msra.mxu0 0.0
    %530 = vmatpush.xpose.msra.mxu0 0.0
    %531 = vmatpush.xpose.msra.mxu0 0.0
    %532 = vmatpush.xpose.msra.mxu0 0.0
    %533 = vmatpush.xpose.msra.mxu0 0.0
    %534 = vmatpush.xpose.msra.mxu0 0.0
    %535 = vmatpush.xpose.msra.mxu0 0.0
    %536 = vmatpush.xpose.msra.mxu0 0.0
    %537 = vmatpush.xpose.msra.mxu0 0.0
    %538 = vmatpush.xpose.msra.mxu0 0.0
    %539 = vmatpush.xpose.msra.mxu0 %v522
    %540 = vmatmul.f32.gmra.mxu0 %v520
    %v541 = vpop.f32.mrf.mxu0
    %v542 = vadd.f32 0.0, %v541
    %543 = vdwg.mxu0
    %544 = vrot.lane.b32.xlu0 %v255, 96
    %v545 = vpop.permute.xlu0 %544
    %546 = vrot.lane.b32.xlu0 %v255, 32
    %v547 = vpop.permute.xlu0 %546
    %v548 = vsel %vm259, %v545, 0
    %v550 = vsel %vm259, %v547, 0
    %552 = vmatpush.xpose.msra.mxu0 0.0
    %553 = vmatpush.xpose.msra.mxu0 0.0
    %554 = vmatpush.xpose.msra.mxu0 0.0
    %555 = vmatpush.xpose.msra.mxu0 0.0
    %556 = vmatpush.xpose.msra.mxu0 0.0
    %557 = vmatpush.xpose.msra.mxu0 0.0
    %558 = vmatpush.xpose.msra.mxu0 0.0
    %559 = vmatpush.xpose.msra.mxu0 0.0
    %560 = vmatpush.xpose.msra.mxu0 0.0
    %561 = vmatpush.xpose.msra.mxu0 0.0
    %562 = vmatpush.xpose.msra.mxu0 0.0
    %563 = vmatpush.xpose.msra.mxu0 0.0
    %564 = vmatpush.xpose.msra.mxu0 0.0
    %565 = vmatpush.xpose.msra.mxu0 0.0
    %566 = vmatpush.xpose.msra.mxu0 0.0
    %567 = vmatpush.xpose.msra.mxu0 %v550
    %568 = vmatmul.f32.gmra.mxu0 %v548
    %v569 = vpop.f32.mrf.mxu0
    %v570 = vadd.f32 0.0, %v569
    %571 = vdwg.mxu0
    %v572 = vmul.f32 %v542, 0.25
    %v573 = vmul.f32 %v570, 0.25
    %v574 = vsel %vm313, %v572, -inf
    %575 = vmax.xlane.f32.xlu0 %v574
    %v576 = vpop.xlane.xlu0 %575
    %v577 = vsel %vm313, %v573, -inf
    %578 = vmax.xlane.f32.xlu0 %v577
    %v579 = vpop.xlane.xlu0 %578
    %v580 = vsub.f32 %v572, %v576
    %v581 = vsub.f32 %v573, %v579
    %v582 = vmul.f32 %v580, 1.442695
    %v583 = vpow.pop %v582
    %v584 = vmul.f32 %v581, 1.442695
    %v585 = vpow.pop %v584
    %v586 = vsel %vm313, %v583, 0.0
    %587 = vadd.xlane.f32.xlu0 %v586
    %v588 = vpop.xlane.xlu0 %587
    %v589 = vsel %vm313, %v585, 0.0
    %590 = vadd.xlane.f32.xlu0 %v589
    %v591 = vpop.xlane.xlu0 %590
    %v592 = vrcp.pop %v588
    %v593 = vrcp.pop %v591
    %v594 = vmul.f32 %v583, %v592
    %v595 = vmul.f32 %v585, %v593
    %596 = vrot.lane.b32.xlu0 %v227, 96
    %v597 = vpop.permute.xlu0 %596
    %v600 = vsel %vm313, %v594, 0
    %602 = vmatpush.msra.mxu0 0.0
    %603 = vmatpush.msra.mxu0 0.0
    %604 = vmatpush.msra.mxu0 0.0
    %605 = vmatpush.msra.mxu0 0.0
    %606 = vmatpush.msra.mxu0 0.0
    %607 = vmatpush.msra.mxu0 0.0
    %608 = vmatpush.msra.mxu0 0.0
    %609 = vmatpush.msra.mxu0 0.0
    %610 = vmatpush.msra.mxu0 0.0
    %611 = vmatpush.msra.mxu0 0.0
    %612 = vmatpush.msra.mxu0 0.0
    %613 = vmatpush.msra.mxu0 0.0
    %614 = vmatpush.msra.mxu0 0.0
    %615 = vmatpush.msra.mxu0 0.0
    %616 = vmatpush.msra.mxu0 0.0
    %617 = vmatpush.msra.mxu0 %v597
    %618 = vmatmul.f32.gmra.mxu0 %v600
    %v619 = vpop.f32.mrf.mxu0
    %v620 = vadd.f32 0.0, %v619
    %621 = vdwg.mxu0
    %622 = vrot.lane.b32.xlu0 %v230, 96
    %v623 = vpop.permute.xlu0 %622
    %v626 = vsel %vm313, %v595, 0
    %628 = vmatpush.msra.mxu0 0.0
    %629 = vmatpush.msra.mxu0 0.0
    %630 = vmatpush.msra.mxu0 0.0
    %631 = vmatpush.msra.mxu0 0.0
    %632 = vmatpush.msra.mxu0 0.0
    %633 = vmatpush.msra.mxu0 0.0
    %634 = vmatpush.msra.mxu0 0.0
    %635 = vmatpush.msra.mxu0 0.0
    %636 = vmatpush.msra.mxu0 0.0
    %637 = vmatpush.msra.mxu0 0.0
    %638 = vmatpush.msra.mxu0 0.0
    %639 = vmatpush.msra.mxu0 0.0
    %640 = vmatpush.msra.mxu0 0.0
    %641 = vmatpush.msra.mxu0 0.0
    %642 = vmatpush.msra.mxu0 0.0
    %643 = vmatpush.msra.mxu0 %v623
    %644 = vmatmul.f32.gmra.mxu0 %v626
    %v645 = vpop.f32.mrf.mxu0
    %v646 = vadd.f32 0.0, %v645
    %647 = vdwg.mxu0
    %648 = vrot.lane.b32.xlu0 %v254, 80
    %v649 = vpop.permute.xlu0 %648
    %650 = vrot.lane.b32.xlu0 %v254, 16
    %v651 = vpop.permute.xlu0 %650
    %v652 = vsel %vm259, %v649, 0
    %v654 = vsel %vm259, %v651, 0
    %656 = vmatpush.xpose.msra.mxu0 0.0
    %657 = vmatpush.xpose.msra.mxu0 0.0
    %658 = vmatpush.xpose.msra.mxu0 0.0
    %659 = vmatpush.xpose.msra.mxu0 0.0
    %660 = vmatpush.xpose.msra.mxu0 0.0
    %661 = vmatpush.xpose.msra.mxu0 0.0
    %662 = vmatpush.xpose.msra.mxu0 0.0
    %663 = vmatpush.xpose.msra.mxu0 0.0
    %664 = vmatpush.xpose.msra.mxu0 0.0
    %665 = vmatpush.xpose.msra.mxu0 0.0
    %666 = vmatpush.xpose.msra.mxu0 0.0
    %667 = vmatpush.xpose.msra.mxu0 0.0
    %668 = vmatpush.xpose.msra.mxu0 0.0
    %669 = vmatpush.xpose.msra.mxu0 0.0
    %670 = vmatpush.xpose.msra.mxu0 0.0
    %671 = vmatpush.xpose.msra.mxu0 %v654
    %672 = vmatmul.f32.gmra.mxu0 %v652
    %v673 = vpop.f32.mrf.mxu0
    %v674 = vadd.f32 0.0, %v673
    %675 = vdwg.mxu0
    %676 = vrot.lane.b32.xlu0 %v255, 80
    %v677 = vpop.permute.xlu0 %676
    %678 = vrot.lane.b32.xlu0 %v255, 16
    %v679 = vpop.permute.xlu0 %678
    %v680 = vsel %vm259, %v677, 0
    %v682 = vsel %vm259, %v679, 0
    %684 = vmatpush.xpose.msra.mxu0 0.0
    %685 = vmatpush.xpose.msra.mxu0 0.0
    %686 = vmatpush.xpose.msra.mxu0 0.0
    %687 = vmatpush.xpose.msra.mxu0 0.0
    %688 = vmatpush.xpose.msra.mxu0 0.0
    %689 = vmatpush.xpose.msra.mxu0 0.0
    %690 = vmatpush.xpose.msra.mxu0 0.0
    %691 = vmatpush.xpose.msra.mxu0 0.0
    %692 = vmatpush.xpose.msra.mxu0 0.0
    %693 = vmatpush.xpose.msra.mxu0 0.0
    %694 = vmatpush.xpose.msra.mxu0 0.0
    %695 = vmatpush.xpose.msra.mxu0 0.0
    %696 = vmatpush.xpose.msra.mxu0 0.0
    %697 = vmatpush.xpose.msra.mxu0 0.0
    %698 = vmatpush.xpose.msra.mxu0 0.0
    %699 = vmatpush.xpose.msra.mxu0 %v682
    %700 = vmatmul.f32.gmra.mxu0 %v680
    %v701 = vpop.f32.mrf.mxu0
    %v702 = vadd.f32 0.0, %v701
    %703 = vdwg.mxu0
    %v704 = vmul.f32 %v674, 0.25
    %v705 = vmul.f32 %v702, 0.25
    %v706 = vsel %vm313, %v704, -inf
    %707 = vmax.xlane.f32.xlu0 %v706
    %v708 = vpop.xlane.xlu0 %707
    %v709 = vsel %vm313, %v705, -inf
    %710 = vmax.xlane.f32.xlu0 %v709
    %v711 = vpop.xlane.xlu0 %710
    %v712 = vsub.f32 %v704, %v708
    %v713 = vsub.f32 %v705, %v711
    %v714 = vmul.f32 %v712, 1.442695
    %v715 = vpow.pop %v714
    %v716 = vmul.f32 %v713, 1.442695
    %v717 = vpow.pop %v716
    %v718 = vsel %vm313, %v715, 0.0
    %719 = vadd.xlane.f32.xlu0 %v718
    %v720 = vpop.xlane.xlu0 %719
    %v721 = vsel %vm313, %v717, 0.0
    %722 = vadd.xlane.f32.xlu0 %v721
    %v723 = vpop.xlane.xlu0 %722
    %v724 = vrcp.pop %v720
    %v725 = vrcp.pop %v723
    %v726 = vmul.f32 %v715, %v724
    %v727 = vmul.f32 %v717, %v725
    %728 = vrot.lane.b32.xlu0 %v227, 80
    %v729 = vpop.permute.xlu0 %728
    %v732 = vsel %vm313, %v726, 0
    %734 = vmatpush.msra.mxu0 0.0
    %735 = vmatpush.msra.mxu0 0.0
    %736 = vmatpush.msra.mxu0 0.0
    %737 = vmatpush.msra.mxu0 0.0
    %738 = vmatpush.msra.mxu0 0.0
    %739 = vmatpush.msra.mxu0 0.0
    %740 = vmatpush.msra.mxu0 0.0
    %741 = vmatpush.msra.mxu0 0.0
    %742 = vmatpush.msra.mxu0 0.0
    %743 = vmatpush.msra.mxu0 0.0
    %744 = vmatpush.msra.mxu0 0.0
    %745 = vmatpush.msra.mxu0 0.0
    %746 = vmatpush.msra.mxu0 0.0
    %747 = vmatpush.msra.mxu0 0.0
    %748 = vmatpush.msra.mxu0 0.0
    %749 = vmatpush.msra.mxu0 %v729
    %750 = vmatmul.f32.gmra.mxu0 %v732
    %v751 = vpop.f32.mrf.mxu0
    %v752 = vadd.f32 0.0, %v751
    %753 = vdwg.mxu0
    %754 = vrot.lane.b32.xlu0 %v230, 80
    %v755 = vpop.permute.xlu0 %754
    %v758 = vsel %vm313, %v727, 0
    %760 = vmatpush.msra.mxu0 0.0
    %761 = vmatpush.msra.mxu0 0.0
    %762 = vmatpush.msra.mxu0 0.0
    %763 = vmatpush.msra.mxu0 0.0
    %764 = vmatpush.msra.mxu0 0.0
    %765 = vmatpush.msra.mxu0 0.0
    %766 = vmatpush.msra.mxu0 0.0
    %767 = vmatpush.msra.mxu0 0.0
    %768 = vmatpush.msra.mxu0 0.0
    %769 = vmatpush.msra.mxu0 0.0
    %770 = vmatpush.msra.mxu0 0.0
    %771 = vmatpush.msra.mxu0 0.0
    %772 = vmatpush.msra.mxu0 0.0
    %773 = vmatpush.msra.mxu0 0.0
    %774 = vmatpush.msra.mxu0 0.0
    %775 = vmatpush.msra.mxu0 %v755
    %776 = vmatmul.f32.gmra.mxu0 %v758
    %v777 = vpop.f32.mrf.mxu0
    %v778 = vadd.f32 0.0, %v777
    %779 = vdwg.mxu0
    %782 = vrot.lane.b32.xlu0 %v487, 16
    %v783 = vpop.permute.xlu0 %782
    %784 = vrot.lane.b32.xlu0 %v514, 16
    %v785 = vpop.permute.xlu0 %784
    %790 = vrot.lane.b32.xlu0 %v620, 32
    %v791 = vpop.permute.xlu0 %790
    %792 = vrot.lane.b32.xlu0 %v646, 32
    %v793 = vpop.permute.xlu0 %792
    %798 = vrot.lane.b32.xlu0 %v752, 48
    %v799 = vpop.permute.xlu0 %798
    %800 = vrot.lane.b32.xlu0 %v778, 48
    %v801 = vpop.permute.xlu0 %800
    %v804 = vsel %vm259, %v357, %v783
    %v805 = vsel %vm259, %v380, %v785
    %vm806 = vcmask 261120
    %v807 = vsel %vm806, %v804, %v791
    %v808 = vsel %vm806, %v805, %v793
    %vm809 = vcmask 392192
    %v810 = vsel %vm809, %v807, %v799
    %v811 = vsel %vm809, %v808, %v801
    %v812 = vld [vmem:[#allocation5] sm:$0xff]
    %v813 = vld [vmem:[#allocation5 + $0x8] sm:$0xff]
    %v814 = vld [vmem:[#allocation5 + $0x10] sm:$0xff]
    %v815 = vld [vmem:[#allocation5 + $0x18] sm:$0xff]
    %v816 = vld [vmem:[#allocation5 + $0x20] sm:$0xff]
    %v817 = vld [vmem:[#allocation5 + $0x28] sm:$0xff]
    %v818 = vld [vmem:[#allocation5 + $0x30] sm:$0xff]
    %v819 = vld [vmem:[#allocation5 + $0x38] sm:$0xff]
    %v821 = vsel %vm118, %v810, 0
    %v824 = vsel %vm118, %v811, 0
    %826 = vmatpush.msra.mxu0 0.0
    %827 = vmatpush.msra.mxu0 0.0
    %828 = vmatpush.msra.mxu0 0.0
    %829 = vmatpush.msra.mxu0 0.0
    %830 = vmatpush.msra.mxu0 0.0
    %831 = vmatpush.msra.mxu0 0.0
    %832 = vmatpush.msra.mxu0 0.0
    %833 = vmatpush.msra.mxu0 0.0
    %834 = vmatpush.msra.mxu0 %v819
    %835 = vmatpush.msra.mxu0 %v818
    %836 = vmatpush.msra.mxu0 %v817
    %837 = vmatpush.msra.mxu0 %v816
    %838 = vmatpush.msra.mxu0 %v815
    %839 = vmatpush.msra.mxu0 %v814
    %840 = vmatpush.msra.mxu0 %v813
    %841 = vmatpush.msra.mxu0 %v812
    %842 = vmatmul.f32.gmra.mxu0 %v821
    %v843 = vpop.f32.mrf.mxu0
    %v844 = vadd.f32 0.0, %v843
    %845 = vmatmul.f32.gmra.mxu0 %v824
    %v846 = vpop.f32.mrf.mxu0
    %v847 = vadd.f32 0.0, %v846
    %848 = vdwg.mxu0
    %v849 = vadd.f32 %v114, %v844
    %v850 = vadd.f32 %v115, %v847
    %v851 = vmul.f32 %v849, %v849
    %v852 = vmul.f32 %v850, %v850
    %v853 = vsel %vm118, %v851, 0.0
    %854 = vadd.xlane.f32.xlu0 %v853
    %v855 = vpop.xlane.xlu0 %854
    %v856 = vsel %vm118, %v852, 0.0
    %857 = vadd.xlane.f32.xlu0 %v856
    %v858 = vpop.xlane.xlu0 %857
    %v859 = vmul.f32 %v855, %v131
    %v860 = vmul.f32 %v858, %v131
    %v861 = vadd.f32 %v859, 1e-05
    %v862 = vadd.f32 %v860, 1e-05
    %v863 = vrsqrt.pop %v861
    %v864 = vmul.f32 %v863, %v861
    %v865 = vmul.f32 %v864, %v863
    %v866 = vmul.f32 0.5, %v865
    %v867 = vsub.f32 1.5, %v866
    %v868 = vmul.f32 %v863, %v867
    %vm869 = vweird.f32 %v861
    %vm870 = vweird.f32 %v863
    %vm871 = vmor %vm869, %vm870
    %v872 = vsel %vm871, %v863, %v868
    %v873 = vrsqrt.pop %v862
    %v874 = vmul.f32 %v873, %v862
    %v875 = vmul.f32 %v874, %v873
    %v876 = vmul.f32 0.5, %v875
    %v877 = vsub.f32 1.5, %v876
    %v878 = vmul.f32 %v873, %v877
    %vm879 = vweird.f32 %v862
    %vm880 = vweird.f32 %v873
    %vm881 = vmor %vm879, %vm880
    %v882 = vsel %vm881, %v873, %v878
    %v883 = vmul.f32 %v849, %v872
    %v884 = vmul.f32 %v850, %v882
    %v885 = vld [vmem:[%s2] sm:$0x1]
    %v887 = vperm.slane %v885, 0
    %v889 = vmul.f32 %v883, %v887
    %v890 = vmul.f32 %v884, %v887
    %v891 = vld [vmem:[%s5] sm:$0xff]
    %v892 = vld [vmem:[%s5 + $0x8] sm:$0xff]
    %v893 = vld [vmem:[%s5 + $0x10] sm:$0xff]
    %v894 = vld [vmem:[%s5 + $0x18] sm:$0xff]
    %v895 = vld [vmem:[%s5 + $0x20] sm:$0xff]
    %v896 = vld [vmem:[%s5 + $0x28] sm:$0xff]
    %v897 = vld [vmem:[%s5 + $0x30] sm:$0xff]
    %v898 = vld [vmem:[%s5 + $0x38] sm:$0xff]
    %v899 = vld [vmem:[%s5 + $0x40] sm:$0xff]
    %v900 = vld [vmem:[%s5 + $0x48] sm:$0xff]
    %v901 = vld [vmem:[%s5 + $0x50] sm:$0xff]
    %v902 = vld [vmem:[%s5 + $0x58] sm:$0xff]
    %v903 = vld [vmem:[%s5 + $0x60] sm:$0xff]
    %v904 = vld [vmem:[%s5 + $0x68] sm:$0xff]
    %v905 = vld [vmem:[%s5 + $0x70] sm:$0xff]
    %v906 = vld [vmem:[%s5 + $0x78] sm:$0xff]
    %v907 = vld [vmem:[%s5 + $0x80] sm:$0xff]
    %v908 = vld [vmem:[%s5 + $0x88] sm:$0xff]
    %v909 = vld [vmem:[%s5 + $0x90] sm:$0xff]
    %v910 = vld [vmem:[%s5 + $0x98] sm:$0xff]
    %v911 = vld [vmem:[%s5 + $0xa0] sm:$0xff]
    %v912 = vld [vmem:[%s5 + $0xa8] sm:$0xff]
    %v913 = vld [vmem:[%s5 + $0xb0] sm:$0xff]
    %v914 = vld [vmem:[%s5 + $0xb8] sm:$0xff]
    %v916 = vsel %vm118, %v889, 0
    %v919 = vsel %vm118, %v890, 0
    %921 = vmatpush.msra.mxu0 0.0
    %922 = vmatpush.msra.mxu0 0.0
    %923 = vmatpush.msra.mxu0 0.0
    %924 = vmatpush.msra.mxu0 0.0
    %925 = vmatpush.msra.mxu0 0.0
    %926 = vmatpush.msra.mxu0 0.0
    %927 = vmatpush.msra.mxu0 0.0
    %928 = vmatpush.msra.mxu0 0.0
    %929 = vmatpush.msra.mxu0 %v912
    %930 = vmatpush.msra.mxu0 %v909
    %931 = vmatpush.msra.mxu0 %v906
    %932 = vmatpush.msra.mxu0 %v903
    %933 = vmatpush.msra.mxu0 %v900
    %934 = vmatpush.msra.mxu0 %v897
    %935 = vmatpush.msra.mxu0 %v894
    %936 = vmatpush.msra.mxu0 %v891
    %937 = vmatmul.f32.gmra.mxu0 %v916
    %v938 = vpop.f32.mrf.mxu0
    %v939 = vadd.f32 0.0, %v938
    %940 = vmatmul.f32.gmra.mxu0 %v919
    %v941 = vpop.f32.mrf.mxu0
    %v942 = vadd.f32 0.0, %v941
    %943 = vdwg.mxu0
    %944 = vmatpush.msra.mxu0 0.0
    %945 = vmatpush.msra.mxu0 0.0
    %946 = vmatpush.msra.mxu0 0.0
    %947 = vmatpush.msra.mxu0 0.0
    %948 = vmatpush.msra.mxu0 0.0
    %949 = vmatpush.msra.mxu0 0.0
    %950 = vmatpush.msra.mxu0 0.0
    %951 = vmatpush.msra.mxu0 0.0
    %952 = vmatpush.msra.mxu0 %v913
    %953 = vmatpush.msra.mxu0 %v910
    %954 = vmatpush.msra.mxu0 %v907
    %955 = vmatpush.msra.mxu0 %v904
    %956 = vmatpush.msra.mxu0 %v901
    %957 = vmatpush.msra.mxu0 %v898
    %958 = vmatpush.msra.mxu0 %v895
    %959 = vmatpush.msra.mxu0 %v892
    %960 = vmatmul.f32.gmra.mxu0 %v916
    %v961 = vpop.f32.mrf.mxu0
    %v962 = vadd.f32 0.0, %v961
    %963 = vmatmul.f32.gmra.mxu0 %v919
    %v964 = vpop.f32.mrf.mxu0
    %v965 = vadd.f32 0.0, %v964
    %966 = vdwg.mxu0
    %967 = vmatpush.msra.mxu0 0.0
    %968 = vmatpush.msra.mxu0 0.0
    %969 = vmatpush.msra.mxu0 0.0
    %970 = vmatpush.msra.mxu0 0.0
    %971 = vmatpush.msra.mxu0 0.0
    %972 = vmatpush.msra.mxu0 0.0
    %973 = vmatpush.msra.mxu0 0.0
    %974 = vmatpush.msra.mxu0 0.0
    %975 = vmatpush.msra.mxu0 %v914
    %976 = vmatpush.msra.mxu0 %v911
    %977 = vmatpush.msra.mxu0 %v908
    %978 = vmatpush.msra.mxu0 %v905
    %979 = vmatpush.msra.mxu0 %v902
    %980 = vmatpush.msra.mxu0 %v899
    %981 = vmatpush.msra.mxu0 %v896
    %982 = vmatpush.msra.mxu0 %v893
    %983 = vmatmul.f32.gmra.mxu0 %v916
    %v984 = vpop.f32.mrf.mxu0
    %v985 = vadd.f32 0.0, %v984
    %986 = vmatmul.f32.gmra.mxu0 %v919
    %v987 = vpop.f32.mrf.mxu0
    %v988 = vadd.f32 0.0, %v987
    %989 = vdwg.mxu0
    %v990 = vxor.u32 %v939, 2147483648
    %v991 = vxor.u32 %v962, 2147483648
    %v992 = vxor.u32 %v942, 2147483648
    %v993 = vxor.u32 %v965, 2147483648
    %v994 = vmul.f32 %v990, 1.442695
    %v995 = vpow.pop %v994
    %v996 = vmul.f32 %v991, 1.442695
    %v997 = vpow.pop %v996
    %v998 = vmul.f32 %v992, 1.442695
    %v999 = vpow.pop %v998
    %v1000 = vmul.f32 %v993, 1.442695
    %v1001 = vpow.pop %v1000
    %v1002 = vadd.f32 %v995, 1.0
    %v1003 = vadd.f32 %v997, 1.0
    %v1004 = vadd.f32 %v999, 1.0
    %v1005 = vadd.f32 %v1001, 1.0
    %v1006 = vrcp.pop %v1002
    %v1007 = vmul.f32 %v1002, %v1006
    %v1008 = vsub.f32 1.0, %v1007
    %v1009 = vmul.f32 %v1006, %v1008
    %v1010 = vadd.f32 %v1006, %v1009
    %vm1011 = vweird.f32 %v1002
    %vm1012 = vweird.f32 %v1006
    %vm1013 = vmor %vm1011, %vm1012
    %v1014 = vsel %vm1013, %v1006, %v1010
    %v1015 = vand.u32 2147483647, %v1002
    %vm1016 = vcmp.eq.f32.partialorder %v1015, 8.507059e+37
    %v1017 = vand.u32 %v1002, 2147483648
    %v1018 = vor.u32 1.1754944e-38, %v1017
    %v1019 = vsel %vm1016, %v1018, %v1014
    %v1020 = vmul.f32 1.0, %v1019
    %v1021 = vrcp.pop %v1003
    %v1022 = vmul.f32 %v1003, %v1021
    %v1023 = vsub.f32 1.0, %v1022
    %v1024 = vmul.f32 %v1021, %v1023
    %v1025 = vadd.f32 %v1021, %v1024
    %vm1026 = vweird.f32 %v1003
    %vm1027 = vweird.f32 %v1021
    %vm1028 = vmor %vm1026, %vm1027
    %v1029 = vsel %vm1028, %v1021, %v1025
    %v1030 = vand.u32 2147483647, %v1003
    %vm1031 = vcmp.eq.f32.partialorder %v1030, 8.507059e+37
    %v1032 = vand.u32 %v1003, 2147483648
    %v1033 = vor.u32 1.1754944e-38, %v1032
    %v1034 = vsel %vm1031, %v1033, %v1029
    %v1035 = vmul.f32 1.0, %v1034
    %v1036 = vrcp.pop %v1004
    %v1037 = vmul.f32 %v1004, %v1036
    %v1038 = vsub.f32 1.0, %v1037
    %v1039 = vmul.f32 %v1036, %v1038
    %v1040 = vadd.f32 %v1036, %v1039
    %vm1041 = vweird.f32 %v1004
    %vm1042 = vweird.f32 %v1036
    %vm1043 = vmor %vm1041, %vm1042
    %v1044 = vsel %vm1043, %v1036, %v1040
    %v1045 = vand.u32 2147483647, %v1004
    %vm1046 = vcmp.eq.f32.partialorder %v1045, 8.507059e+37
    %v1047 = vand.u32 %v1004, 2147483648
    %v1048 = vor.u32 1.1754944e-38, %v1047
    %v1049 = vsel %vm1046, %v1048, %v1044
    %v1050 = vmul.f32 1.0, %v1049
    %v1051 = vrcp.pop %v1005
    %v1052 = vmul.f32 %v1005, %v1051
    %v1053 = vsub.f32 1.0, %v1052
    %v1054 = vmul.f32 %v1051, %v1053
    %v1055 = vadd.f32 %v1051, %v1054
    %vm1056 = vweird.f32 %v1005
    %vm1057 = vweird.f32 %v1051
    %vm1058 = vmor %vm1056, %vm1057
    %v1059 = vsel %vm1058, %v1051, %v1055
    %v1060 = vand.u32 2147483647, %v1005
    %vm1061 = vcmp.eq.f32.partialorder %v1060, 8.507059e+37
    %v1062 = vand.u32 %v1005, 2147483648
    %v1063 = vor.u32 1.1754944e-38, %v1062
    %v1064 = vsel %vm1061, %v1063, %v1059
    %v1065 = vmul.f32 1.0, %v1064
    %v1066 = vmul.f32 %v939, %v1020
    %v1067 = vmul.f32 %v962, %v1035
    %v1068 = vmul.f32 %v942, %v1050
    %v1069 = vmul.f32 %v965, %v1065
    %1074 = vrot.lane.b32.xlu0 %v962, 64
    %v1075 = vpop.permute.xlu0 %1074
    %1076 = vrot.lane.b32.xlu0 %v985, 64
    %v1077 = vpop.permute.xlu0 %1076
    %1078 = vrot.lane.b32.xlu0 %v965, 64
    %v1079 = vpop.permute.xlu0 %1078
    %1080 = vrot.lane.b32.xlu0 %v988, 64
    %v1081 = vpop.permute.xlu0 %1080
    %v1082 = vsel %vm118, %v1075, %v1077
    %v1083 = vsel %vm118, %v1079, %v1081
    %v1088 = vmul.f32 %v1066, %v1082
    %v1089 = vmul.f32 %v1067, %v1077
    %v1090 = vmul.f32 %v1068, %v1083
    %v1091 = vmul.f32 %v1069, %v1081
    %v1092 = vld [vmem:[%s6] sm:$0xff]
    %v1093 = vld [vmem:[%s6 + $0x8] sm:$0xff]
    %v1094 = vld [vmem:[%s6 + $0x10] sm:$0xff]
    %v1095 = vld [vmem:[%s6 + $0x18] sm:$0xff]
    %v1096 = vld [vmem:[%s6 + $0x20] sm:$0xff]
    %v1097 = vld [vmem:[%s6 + $0x28] sm:$0xff]
    %v1098 = vld [vmem:[%s6 + $0x30] sm:$0xff]
    %v1099 = vld [vmem:[%s6 + $0x38] sm:$0xff]
    %v1100 = vld [vmem:[%s6 + $0x40] sm:$0xff]
    %v1101 = vld [vmem:[%s6 + $0x48] sm:$0xff]
    %v1102 = vld [vmem:[%s6 + $0x50] sm:$0xff]
    %v1103 = vld [vmem:[%s6 + $0x58] sm:$0xff]
    %v1104 = vld [vmem:[%s6 + $0x60] sm:$0xff]
    %v1105 = vld [vmem:[%s6 + $0x68] sm:$0xff]
    %v1106 = vld [vmem:[%s6 + $0x70] sm:$0xff]
    %v1107 = vld [vmem:[%s6 + $0x78] sm:$0xff]
    %v1108 = vld [vmem:[%s6 + $0x80] sm:$0xff]
    %v1109 = vld [vmem:[%s6 + $0x88] sm:$0xff]
    %v1110 = vld [vmem:[%s6 + $0x90] sm:$0xff]
    %v1111 = vld [vmem:[%s6 + $0x98] sm:$0xff]
    %v1112 = vld [vmem:[%s6 + $0xa0] sm:$0xff]
    %v1113 = vld [vmem:[%s6 + $0xa8] sm:$0xff]
    %v1114 = vld [vmem:[%s6 + $0xb0] sm:$0xff]
    %v1115 = vld [vmem:[%s6 + $0xb8] sm:$0xff]
    %v1117 = vsel %vm118, %v1089, 0
    %v1120 = vsel %vm118, %v1091, 0
    %1122 = vmatpush.msra.mxu0 %v1107
    %1123 = vmatpush.msra.mxu0 %v1106
    %1124 = vmatpush.msra.mxu0 %v1105
    %1125 = vmatpush.msra.mxu0 %v1104
    %1126 = vmatpush.msra.mxu0 %v1103
    %1127 = vmatpush.msra.mxu0 %v1102
    %1128 = vmatpush.msra.mxu0 %v1101
    %1129 = vmatpush.msra.mxu0 %v1100
    %1130 = vmatpush.msra.mxu0 %v1099
    %1131 = vmatpush.msra.mxu0 %v1098
    %1132 = vmatpush.msra.mxu0 %v1097
    %1133 = vmatpush.msra.mxu0 %v1096
    %1134 = vmatpush.msra.mxu0 %v1095
    %1135 = vmatpush.msra.mxu0 %v1094
    %1136 = vmatpush.msra.mxu0 %v1093
    %1137 = vmatpush.msra.mxu0 %v1092
    %1138 = vmatmul.f32.gmra.mxu0 %v1088
    %v1139 = vpop.f32.mrf.mxu0
    %v1140 = vadd.f32 0.0, %v1139
    %1141 = vmatmul.f32.gmra.mxu0 %v1090
    %v1142 = vpop.f32.mrf.mxu0
    %v1143 = vadd.f32 0.0, %v1142
    %1144 = vdwg.mxu0
    %1145 = vmatpush.msra.mxu0 0.0
    %1146 = vmatpush.msra.mxu0 0.0
    %1147 = vmatpush.msra.mxu0 0.0
    %1148 = vmatpush.msra.mxu0 0.0
    %1149 = vmatpush.msra.mxu0 0.0
    %1150 = vmatpush.msra.mxu0 0.0
    %1151 = vmatpush.msra.mxu0 0.0
    %1152 = vmatpush.msra.mxu0 0.0
    %1153 = vmatpush.msra.mxu0 %v1115
    %1154 = vmatpush.msra.mxu0 %v1114
    %1155 = vmatpush.msra.mxu0 %v1113
    %1156 = vmatpush.msra.mxu0 %v1112
    %1157 = vmatpush.msra.mxu0 %v1111
    %1158 = vmatpush.msra.mxu0 %v1110
    %1159 = vmatpush.msra.mxu0 %v1109
    %1160 = vmatpush.msra.mxu0 %v1108
    %1161 = vmatmul.f32.gmra.mxu0 %v1117
    %v1162 = vpop.f32.mrf.mxu0
    %v1163 = vadd.f32 %v1140, %v1162
    %1164 = vmatmul.f32.gmra.mxu0 %v1120
    %v1165 = vpop.f32.mrf.mxu0
    %v1166 = vadd.f32 %v1143, %v1165
    %1167 = vdwg.mxu0
    %v1168 = vadd.f32 %v849, %v1163
    %v1169 = vadd.f32 %v850, %v1166
    %1170 = vst.msk [vmem:[#allocation11] sm:$0xff] %vm118, %v1168
    %1171 = vst.msk [vmem:[#allocation11 + $0x8] sm:$0xff] %vm118, %v1169
    // Predicated region
    $region62: #{encoder_block.1} parent=1 // pred_check
      _
    $region63: #{encoder_block.1} parent=1 // pred_check_branch
      %1173 = sbr.rel (0) target = $region65
    $region64: #{encoder_block.1} parent=1 // pred_region
      %1175 = vsyncadd [#allocation4], 0
      %s1176 = sshll.u32 [#allocation11], 4
      %s1177 = int_to_ptr.vmem [resolvable:$true] %s1176
      %s1178 = sshll.u32 %s10, 4
      %s1179 = int_to_ptr.hbm [resolvable:$true] %s1178
      %1184 = dma.vmem_to_hbm [thread:$0]  %s1177, 256, %s1179, [#allocation4], 128, 128, 8
    $region65: #{encoder_block.1} parent=1 // pred_fallthru
      _
    // Predicated region
    $region66: #{encoder_block.1} parent=1 // pred_check
      _
    $region67: #{encoder_block.1} parent=1 // pred_check_branch
      %1186 = sbr.rel (0) target = $region69
    $region68: #{encoder_block.1} parent=1 // pred_region
      %1188 = dma.done [#allocation4], 256
    $region69: #{encoder_block.1} parent=1 // pred_fallthru
      _
    %1189 = vsyncpa [#allocation3], 1
    %1190 = vsyncpa [#allocation6], 1
    %1191 = vsyncpa [#allocation9], 1
    %1192 = vsyncpa [#allocation4], 1

</llo_original>
